<compile_context>
chip_gen: v5e
topology: v5e:2x2
jax: 0.10.0
libtpu: 0.0.40
codegen_flags: <defaults>
</compile_context>

<pallas_src>
from functools import partial

import jax
import jax.numpy as jnp
from jax.experimental import pallas as pl
from jax.experimental.pallas import tpu as pltpu


# ----------------------------------------------------------------------------- helpers
def _round_up(x, m):
    return ((x + m - 1) // m) * m


def _erf(x):
    # Abramowitz & Stegun 7.1.26 polynomial approximation, |error| <= 1.5e-7.
    a1, a2, a3, a4, a5 = (0.254829592, -0.284496736, 1.421413741,
                          -1.453152027, 1.061405429)
    p = 0.3275911
    ax = jnp.abs(x)
    # EUP reciprocal (approx) keeps the divide off the VALU slot.
    t = pl.reciprocal(1.0 + p * ax, approx=True)
    poly = ((((a5 * t + a4) * t + a3) * t + a2) * t + a1) * t
    e = 1.0 - poly * jnp.exp(-ax * ax)
    return jnp.where(x < 0.0, -e, e)


def _gelu_exact(x):
    # Matches PyTorch F.gelu default (erf-based, NOT the tanh approximation).
    return 0.5 * x * (1.0 + _erf(x * 0.7071067811865476))


# ----------------------------------------------------------------------------- kernel
def _ffn_geglu_kernel(x_ref, w1v_ref, w1g_ref, b1v_ref, b1g_ref,
                      w2_ref, b2_ref, o_ref, acc_ref):
    # x_ref:   (TM, D)   row tile
    # w1v_ref: (D, TI)   proj1.weight^T, value half, TI-chunk of the padded I dim
    # w1g_ref: (D, TI)   proj1.weight^T, gate  half
    # b1v_ref: (1, TI)   proj1.bias, value half
    # b1g_ref: (1, TI)   proj1.bias, gate  half
    # w2_ref:  (TI, D)   proj2.weight^T, TI-chunk of rows
    # b2_ref:  (1, D)    proj2.bias
    # o_ref:   (TM, D)   output tile (written at the last k step)
    # acc_ref: (TM, D)   f32 accumulator scratch, resident across the k axis
    k = pl.program_id(1)

    @pl.when(k == 0)
    def _init():
        acc_ref[...] = jnp.zeros_like(acc_ref)

    x = x_ref[...]
    # proj1 (value / gate halves as separate lane-aligned operands): native-dtype
    # operands on the MXU, f32 accumulation.
    hv = jnp.dot(x, w1v_ref[...], preferred_element_type=jnp.float32)
    hv = hv + b1v_ref[...].astype(jnp.float32)
    hg = jnp.dot(x, w1g_ref[...], preferred_element_type=jnp.float32)
    hg = hg + b1g_ref[...].astype(jnp.float32)

    # GEGLU in f32. Zero-padded gate columns give gelu(0)*0 = 0, so padding is inert.
    act = _gelu_exact(hg) * hv
    # TODO(synk): nn.Dropout is identity at inference (and p=0.0 default); not modeled.

    # proj2 partial product accumulated in f32; cast activations back to the
    # weight dtype so bf16 weights keep the fast bf16 MXU path (no-op for f32).
    acc_ref[...] += jnp.dot(act.astype(w2_ref.dtype), w2_ref[...],
                            preferred_element_type=jnp.float32)

    @pl.when(k == pl.num_programs(1) - 1)
    def _finalize():
        out = acc_ref[...] + b2_ref[...].astype(jnp.float32)
        o_ref[...] = out.astype(o_ref.dtype)


# ----------------------------------------------------------------------------- planning
def _vmem_capacity_bytes():
    """Best-effort physical VMEM capacity for this chip generation."""
    try:
        cap = getattr(pltpu.get_tpu_info(), "vmem_capacity_bytes", None)
        if cap:
            return int(cap)
    except Exception:
        pass
    cap = 128 << 20                      # v5e / v6e (and v4) default
    try:
        kind = jax.devices()[0].device_kind.lower()
        if "v7" in kind or "7x" in kind:
            cap = 64 << 20               # v7x has 64 MiB per TensorCore
    except Exception:
        pass
    return cap


def _vmem_plan():
    """(tile-sizing budget, vmem_limit_bytes) derived from physical capacity."""
    cap = _vmem_capacity_bytes()
    # ~96 MiB on 128-MiB parts (v5e/v6e), ~48 MiB on v7x; always leave headroom.
    vmem_limit = max(32 << 20, min(96 << 20, cap - (16 << 20)))
    budget = vmem_limit - (4 << 20)      # slack for compiler scratch / semaphores
    return budget, vmem_limit


def _bytes_needed(tm, ti, d, io_isz, w_isz, w_bufs):
    io_tiles = 2 * 2 * tm * d * io_isz            # double-buffered x & out tiles
    acc = 2 * tm * d * 4                          # f32 acc scratch + dot temp
    weights = w_bufs * (3 * d * ti + 2 * ti + d) * w_isz
    interm = 5 * tm * ti * 4                      # hv/hg/act + live erf temps (f32)
    return io_tiles + acc + weights + interm


def _choose_tiles(n_rows, d, i_pad, io_isz, w_isz, budget):
    """Pick (TM row tile, TI intermediate chunk). TI divides i_pad; both 128-mult."""
    n_units = i_pad // 128
    ti_cands = [u * 128 for u in range(n_units, 0, -1) if n_units % u == 0]
    tm, ti = 128, ti_cands[-1]
    found = False
    # Prefer the largest MXU-friendly row tile; for that TM the largest TI chunk.
    for tm_c in (1024, 512, 256, 128):
        for ti_c in ti_cands:
            w_bufs = 1 if ti_c == i_pad else 2    # single-buffer grid-invariant weights
            if _bytes_needed(tm_c, ti_c, d, io_isz, w_isz, w_bufs) <= budget:
                tm, ti = tm_c, ti_c
                found = True
                break
        if found:
            break
    # Clamp to the (8-aligned) number of rows actually present.
    tm = min(tm, max(8, _round_up(n_rows, 8)))
    # v7x megacore: ensure the parallel row axis has >= 2 steps when there is
    # enough work to split (an extra step is harmless on 1-TC chips).
    if n_rows > 256 and pl.cdiv(n_rows, tm) < 2:
        tm = min(tm, max(128, _round_up(pl.cdiv(n_rows, 2), 128)))
    return tm, ti


# ----------------------------------------------------------------------------- wrapper
def prepare_ffn_params(w1, b1, w2, b2, *, param_dtype=None):
    """One-time weight prep (do this at model load, NOT per forward call).

    PyTorch layouts: proj1.weight (2*I, D), proj1.bias (2*I,),
                     proj2.weight (D, I),   proj2.bias (D,).
    Produces (in, out)-layout operands with the value/gate halves split into
    separate arrays and the intermediate dim zero-padded to a multiple of 128
    so matmul dims and chunk boundaries are lane-aligned.
    """
    two_i, d = w1.shape
    assert two_i % 2 == 0
    inter = two_i // 2
    assert b1.shape == (two_i,)
    assert w2.shape == (d, inter)
    assert b2.shape == (d,)

    if param_dtype is not None:
        w1, b1, w2, b2 = (a.astype(param_dtype) for a in (w1, b1, w2, b2))

    i_pad = max(128, _round_up(inter, 128))
    pad_i = i_pad - inter

    # PyTorch chunk order: first half = value ("x"), second half = gate.
    w1v = jnp.pad(jnp.transpose(w1[:inter, :]), ((0, 0), (0, pad_i)))   # (D, I_pad)
    w1g = jnp.pad(jnp.transpose(w1[inter:, :]), ((0, 0), (0, pad_i)))   # (D, I_pad)
    b1v = jnp.pad(b1[:inter], (0, pad_i)).reshape(1, i_pad)
    b1g = jnp.pad(b1[inter:], (0, pad_i)).reshape(1, i_pad)
    w2t = jnp.pad(jnp.transpose(w2), ((0, pad_i), (0, 0)))              # (I_pad, D)
    b2r = b2.reshape(1, d)

    return dict(dim=d, inter=inter, inter_pad=i_pad,
                w1v=w1v, w1g=w1g, b1v=b1v, b1g=b1g, w2t=w2t, b2=b2r)


def _build_ffn_call(n_rows, d, i_pad, tm, ti, out_dtype, single_buffer, vmem_limit):
    n_k = i_pad // ti
    grid = (pl.cdiv(n_rows, tm), n_k)

    # Weight/bias blocks are grid-invariant only when there is a single k step;
    # then one buffer each is enough (saves VMEM that goes straight into TM).
    use_single = bool(single_buffer) and n_k == 1

    def wspec(shape, imap):
        if use_single:
            return pl.BlockSpec(shape, imap, pipeline_mode=pl.Buffered(1))
        return pl.BlockSpec(shape, imap)

    in_specs = [
        pl.BlockSpec((tm, d), lambda i, k: (i, 0)),     # x rows
        wspec((d, ti), lambda i, k: (0, k)),            # proj1.weight^T (value)
        wspec((d, ti), lambda i, k: (0, k)),            # proj1.weight^T (gate)
        wspec((1, ti), lambda i, k: (0, k)),            # proj1.bias (value)
        wspec((1, ti), lambda i, k: (0, k)),            # proj1.bias (gate)
        wspec((ti, d), lambda i, k: (k, 0)),            # proj2.weight^T
        wspec((1, d), lambda i, k: (0, 0)),             # proj2.bias
    ]

    cp_kwargs = dict(dimension_semantics=("parallel", "arbitrary"))
    if vmem_limit is not None:
        cp_kwargs["vmem_limit_bytes"] = int(vmem_limit)

    return pl.pallas_call(
        _ffn_geglu_kernel,
        out_shape=jax.ShapeDtypeStruct((n_rows, d), out_dtype),
        grid_spec=pltpu.PrefetchScalarGridSpec(
            num_scalar_prefetch=0,
            grid=grid,
            in_specs=in_specs,
            out_specs=pl.BlockSpec((tm, d), lambda i, k: (i, 0)),
            scratch_shapes=[pltpu.VMEM((tm, d), jnp.float32)],
        ),
        compiler_params=pltpu.CompilerParams(**cp_kwargs),
    )


def feed_forward(x, params, *, tm=None, ti=None):
    """GEGLU FeedForward forward pass. `params` comes from prepare_ffn_params.

    For repeated calls wrap this in jax.jit (the weight prep is already hoisted).
    """
    d = params["dim"]
    i_pad = params["inter_pad"]
    orig_shape = x.shape
    assert orig_shape[-1] == d

    n_rows = 1
    for s in orig_shape[:-1]:
        n_rows *= s
    x2 = x.reshape(n_rows, d)

    io_isz = jnp.dtype(x.dtype).itemsize
    w_isz = jnp.dtype(params["w1v"].dtype).itemsize
    budget, vmem_limit = _vmem_plan()

    tm0, ti0 = _choose_tiles(n_rows, d, i_pad, io_isz, w_isz, budget)
    tm = tm0 if tm is None else tm
    ti = ti0 if ti is None else ti
    assert i_pad % ti == 0, "ti must divide the padded intermediate dim"

    args = (x2, params["w1v"], params["w1g"], params["b1v"], params["b1g"],
            params["w2t"], params["b2"])

    # Attempt configs in order; fall back gracefully if single-buffered weight
    # specs (pipeline_mode) are unsupported on this jax version or a tile
    # config / VMEM limit does not fit on this chip generation.
    attempts = [
        (tm, ti, True, vmem_limit),
        (tm, ti, False, vmem_limit),
        (min(tm, 256), 128, False, None),
    ]
    last_err = None
    for a_tm, a_ti, sbuf, vlim in attempts:
        a_tm = min(a_tm, max(8, _round_up(n_rows, 8)))
        try:
            call = _build_ffn_call(n_rows, d, i_pad, a_tm, a_ti, x.dtype, sbuf, vlim)
            out = call(*args)
            return out.reshape(orig_shape)
        except Exception as e:  # retry with a safer configuration
            last_err = e
    raise last_err


# ----------------------------------------------------------------------------- reference
def _reference(x, w1, b1, w2, b2):
    xf = x.astype(jnp.float32)
    h = xf @ w1.T.astype(jnp.float32) + b1.astype(jnp.float32)
    inter = h.shape[-1] // 2
    value, gate = h[..., :inter], h[..., inter:]
    act = jax.nn.gelu(gate, approximate=False) * value
    out = act @ w2.T.astype(jnp.float32) + b2.astype(jnp.float32)
    return out.astype(x.dtype)


if __name__ == "__main__":
    # Small shapes consistent with the module: dim=32, mult=4 -> I = int(32*4*2/3) = 85.
    B, T, DIM, MULT = 2, 8, 32, 4.0
    INTER = int(DIM * MULT * 2 / 3)

    key = jax.random.PRNGKey(0)
    kx, kw1, kb1, kw2, kb2 = jax.random.split(key, 5)

    x = jax.random.normal(kx, (B, T, DIM), dtype=jnp.float32)
    # PyTorch nn.Linear layout: weight (out, in), bias (out,).
    w1 = 0.05 * jax.random.normal(kw1, (2 * INTER, DIM), dtype=jnp.float32)
    b1 = 0.05 * jax.random.normal(kb1, (2 * INTER,), dtype=jnp.float32)
    w2 = 0.05 * jax.random.normal(kw2, (DIM, INTER), dtype=jnp.float32)
    b2 = 0.05 * jax.random.normal(kb2, (DIM,), dtype=jnp.float32)

    # One-time weight prep (transpose / split / pad hoisted out of the fwd path).
    params = prepare_ffn_params(w1, b1, w2, b2)

    out = feed_forward(x, params)
    out = jax.block_until_ready(out)

    ref = _reference(x, w1, b1, w2, b2)
    assert out.shape == (B, T, DIM)
    # Tolerance covers MXU f32 matmul pass differences vs the XLA reference; the
    # in-kernel erf polynomial (+ approx reciprocal) is accurate well below this.
    assert jnp.allclose(out, ref, atol=5e-3, rtol=5e-3), (
        "mismatch vs reference, max abs err = "
        f"{float(jnp.max(jnp.abs(out - ref)))}")

    print("KERNEL_OK")
</pallas_src>

<mosaic_0001>
module attributes {stable_mosaic.version = 11 : i64} {
  func.func @_ffn_geglu_kernel(%arg0: i32, %arg1: i32, %arg2: memref<16x32xf32, #tpu.memory_space<vmem>>, %arg3: memref<32x128xf32, #tpu.memory_space<vmem>>, %arg4: memref<32x128xf32, #tpu.memory_space<vmem>>, %arg5: memref<1x128xf32, #tpu.memory_space<vmem>>, %arg6: memref<1x128xf32, #tpu.memory_space<vmem>>, %arg7: memref<128x32xf32, #tpu.memory_space<vmem>>, %arg8: memref<1x32xf32, #tpu.memory_space<vmem>>, %arg9: memref<16x32xf32, #tpu.memory_space<vmem>>, %arg10: memref<16x32xf32, #tpu.memory_space<vmem>>) attributes {dimension_semantics = [#tpu.dimension_semantics<parallel>, #tpu.dimension_semantics<arbitrary>], iteration_bounds = array<i64: 1, 1>, scalar_prefetch = 0 : i64, scratch_operands = 1 : i64, tpu.core_type = #tpu.core_type<tc>, window_params = [{transform_indices = @transform_0, window_bounds = array<i64: 16, 32>}, {pipeline_mode = #tpu.pipeline_mode<synchronous>, transform_indices = @transform_1, window_bounds = array<i64: 32, 128>}, {pipeline_mode = #tpu.pipeline_mode<synchronous>, transform_indices = @transform_2, window_bounds = array<i64: 32, 128>}, {pipeline_mode = #tpu.pipeline_mode<synchronous>, transform_indices = @transform_3, window_bounds = array<i64: 1, 128>}, {pipeline_mode = #tpu.pipeline_mode<synchronous>, transform_indices = @transform_4, window_bounds = array<i64: 1, 128>}, {pipeline_mode = #tpu.pipeline_mode<synchronous>, transform_indices = @transform_5, window_bounds = array<i64: 128, 32>}, {pipeline_mode = #tpu.pipeline_mode<synchronous>, transform_indices = @transform_6, window_bounds = array<i64: 1, 32>}, {transform_indices = @transform_7, window_bounds = array<i64: 16, 32>}]} {
    %c0_i32 = arith.constant 0 : i32
    %0 = arith.cmpi eq, %arg1, %c0_i32 : i32
    %1 = arith.extui %0 : i1 to i32
    %c0_i32_0 = arith.constant 0 : i32
    %2 = arith.cmpi ne, %1, %c0_i32_0 : i32
    scf.if %2 {
      %cst_34 = arith.constant 0.000000e+00 : f32
      %62 = vector.broadcast %cst_34 : f32 to vector<16x32xf32>
      %c0_35 = arith.constant 0 : index
      %c0_36 = arith.constant 0 : index
      %63 = vector.load %arg10[%c0_35, %c0_36] : memref<16x32xf32, #tpu.memory_space<vmem>>, vector<16x32xf32>
      tpu.vector_store %arg10[%c0_35, %c0_36], %62 {strides = array<i32>} : memref<16x32xf32, #tpu.memory_space<vmem>>, vector<16x32xf32>,
    } else {
    }
    %c0 = arith.constant 0 : index
    %c0_1 = arith.constant 0 : index
    %3 = vector.load %arg2[%c0, %c0_1] : memref<16x32xf32, #tpu.memory_space<vmem>>, vector<16x32xf32>
    %c0_2 = arith.constant 0 : index
    %c0_3 = arith.constant 0 : index
    %4 = vector.load %arg3[%c0_2, %c0_3] : memref<32x128xf32, #tpu.memory_space<vmem>>, vector<32x128xf32>
    %cst = arith.constant dense<0.000000e+00> : vector<16x128xf32>
    %5 = tpu.matmul %3, %4, %cst {dimension_numbers = #tpu.dot_dimension_numbers<[1], [0], [0], [1], [0, 0, 1, 1], [], []>} : vector<16x32xf32>, vector<32x128xf32>, vector<16x128xf32> -> vector<16x128xf32>
    %c0_4 = arith.constant 0 : index
    %c0_5 = arith.constant 0 : index
    %6 = vector.load %arg5[%c0_4, %c0_5] : memref<1x128xf32, #tpu.memory_space<vmem>>, vector<1x128xf32>
    %7 = vector.broadcast %6 : vector<1x128xf32> to vector<16x128xf32>
    %8 = arith.addf %5, %7 : vector<16x128xf32>
    %c0_6 = arith.constant 0 : index
    %c0_7 = arith.constant 0 : index
    %9 = vector.load %arg4[%c0_6, %c0_7] : memref<32x128xf32, #tpu.memory_space<vmem>>, vector<32x128xf32>
    %cst_8 = arith.constant dense<0.000000e+00> : vector<16x128xf32>
    %10 = tpu.matmul %3, %9, %cst_8 {dimension_numbers = #tpu.dot_dimension_numbers<[1], [0], [0], [1], [0, 0, 1, 1], [], []>} : vector<16x32xf32>, vector<32x128xf32>, vector<16x128xf32> -> vector<16x128xf32>
    %c0_9 = arith.constant 0 : index
    %c0_10 = arith.constant 0 : index
    %11 = vector.load %arg6[%c0_9, %c0_10] : memref<1x128xf32, #tpu.memory_space<vmem>>, vector<1x128xf32>
    %12 = vector.broadcast %11 : vector<1x128xf32> to vector<16x128xf32>
    %13 = arith.addf %10, %12 : vector<16x128xf32>
    %cst_11 = arith.constant 5.000000e-01 : f32
    %14 = vector.broadcast %cst_11 : f32 to vector<16x128xf32>
    %15 = arith.mulf %14, %13 : vector<16x128xf32>
    %cst_12 = arith.constant 0.707106769 : f32
    %16 = vector.broadcast %cst_12 : f32 to vector<16x128xf32>
    %17 = arith.mulf %13, %16 : vector<16x128xf32>
    %18 = math.absf %17 : vector<16x128xf32>
    %cst_13 = arith.constant 0.327591091 : f32
    %19 = vector.broadcast %cst_13 : f32 to vector<16x128xf32>
    %20 = arith.mulf %19, %18 : vector<16x128xf32>
    %cst_14 = arith.constant 1.000000e+00 : f32
    %21 = vector.broadcast %cst_14 : f32 to vector<16x128xf32>
    %22 = arith.addf %21, %20 : vector<16x128xf32>
    %23 = tpu.reciprocal %22 {approx = true} : vector<16x128xf32> -> vector<16x128xf32>
    %cst_15 = arith.constant 1.06140542 : f32
    %24 = vector.broadcast %cst_15 : f32 to vector<16x128xf32>
    %25 = arith.mulf %24, %23 : vector<16x128xf32>
    %cst_16 = arith.constant -1.45315206 : f32
    %26 = vector.broadcast %cst_16 : f32 to vector<16x128xf32>
    %27 = arith.addf %25, %26 : vector<16x128xf32>
    %28 = arith.mulf %27, %23 : vector<16x128xf32>
    %cst_17 = arith.constant 1.42141378 : f32
    %29 = vector.broadcast %cst_17 : f32 to vector<16x128xf32>
    %30 = arith.addf %28, %29 : vector<16x128xf32>
    %31 = arith.mulf %30, %23 : vector<16x128xf32>
    %cst_18 = arith.constant -0.284496725 : f32
    %32 = vector.broadcast %cst_18 : f32 to vector<16x128xf32>
    %33 = arith.addf %31, %32 : vector<16x128xf32>
    %34 = arith.mulf %33, %23 : vector<16x128xf32>
    %cst_19 = arith.constant 0.254829586 : f32
    %35 = vector.broadcast %cst_19 : f32 to vector<16x128xf32>
    %36 = arith.addf %34, %35 : vector<16x128xf32>
    %37 = arith.mulf %36, %23 : vector<16x128xf32>
    %cst_20 = arith.constant 0.000000e+00 : f32
    %38 = vector.broadcast %cst_20 : f32 to vector<16x128xf32>
    %39 = arith.subf %38, %18 : vector<16x128xf32>
    %40 = arith.mulf %39, %18 : vector<16x128xf32>
    %41 = math.exp %40 : vector<16x128xf32>
    %42 = arith.mulf %37, %41 : vector<16x128xf32>
    %cst_21 = arith.constant 1.000000e+00 : f32
    %43 = vector.broadcast %cst_21 : f32 to vector<16x128xf32>
    %44 = arith.subf %43, %42 : vector<16x128xf32>
    %cst_22 = arith.constant 0.000000e+00 : f32
    %45 = vector.broadcast %cst_22 : f32 to vector<16x128xf32>
    %46 = arith.cmpf olt, %17, %45 : vector<16x128xf32>
    %cst_23 = arith.constant 0.000000e+00 : f32
    %47 = vector.broadcast %cst_23 : f32 to vector<16x128xf32>
    %48 = arith.subf %47, %44 : vector<16x128xf32>
    %49 = arith.select %46, %48, %44 : vector<16x128xi1>, vector<16x128xf32>
    %cst_24 = arith.constant 1.000000e+00 : f32
    %50 = vector.broadcast %cst_24 : f32 to vector<16x128xf32>
    %51 = arith.addf %50, %49 : vector<16x128xf32>
    %52 = arith.mulf %15, %51 : vector<16x128xf32>
    %53 = arith.mulf %52, %8 : vector<16x128xf32>
    %c0_25 = arith.constant 0 : index
    %c0_26 = arith.constant 0 : index
    %54 = vector.load %arg10[%c0_25, %c0_26] : memref<16x32xf32, #tpu.memory_space<vmem>>, vector<16x32xf32>
    %c0_27 = arith.constant 0 : index
    %c0_28 = arith.constant 0 : index
    %55 = vector.load %arg7[%c0_27, %c0_28] : memref<128x32xf32, #tpu.memory_space<vmem>>, vector<128x32xf32>
    %cst_29 = arith.constant dense<0.000000e+00> : vector<16x32xf32>
    %56 = tpu.matmul %53, %55, %cst_29 {dimension_numbers = #tpu.dot_dimension_numbers<[1], [0], [0], [1], [0, 0, 1, 1], [], []>} : vector<16x128xf32>, vector<128x32xf32>, vector<16x32xf32> -> vector<16x32xf32>
    %57 = arith.addf %54, %56 : vector<16x32xf32>
    %c0_30 = arith.constant 0 : index
    %c0_31 = arith.constant 0 : index
    %58 = vector.load %arg10[%c0_30, %c0_31] : memref<16x32xf32, #tpu.memory_space<vmem>>, vector<16x32xf32>
    tpu.vector_store %arg10[%c0_30, %c0_31], %57 {strides = array<i32>} : memref<16x32xf32, #tpu.memory_space<vmem>>, vector<16x32xf32>,
    %c0_i32_32 = arith.constant 0 : i32
    %59 = arith.cmpi eq, %arg1, %c0_i32_32 : i32
    %60 = arith.extui %59 : i1 to i32
    %c0_i32_33 = arith.constant 0 : i32
    %61 = arith.cmpi ne, %60, %c0_i32_33 : i32
    scf.if %61 {
      %c0_34 = arith.constant 0 : index
      %c0_35 = arith.constant 0 : index
      %62 = vector.load %arg10[%c0_34, %c0_35] : memref<16x32xf32, #tpu.memory_space<vmem>>, vector<16x32xf32>
      %c0_36 = arith.constant 0 : index
      %c0_37 = arith.constant 0 : index
      %63 = vector.load %arg8[%c0_36, %c0_37] : memref<1x32xf32, #tpu.memory_space<vmem>>, vector<1x32xf32>
      %64 = vector.broadcast %63 : vector<1x32xf32> to vector<16x32xf32>
      %65 = arith.addf %62, %64 : vector<16x32xf32>
      %c0_38 = arith.constant 0 : index
      %c0_39 = arith.constant 0 : index
      %66 = vector.load %arg9[%c0_38, %c0_39] : memref<16x32xf32, #tpu.memory_space<vmem>>, vector<16x32xf32>
      tpu.vector_store %arg9[%c0_38, %c0_39], %65 {strides = array<i32>} : memref<16x32xf32, #tpu.memory_space<vmem>>, vector<16x32xf32>,
    } else {
    }
    return
  }
  func.func @transform_0(%arg0: i32, %arg1: i32) -> (i32, i32) {
    %c0_i32 = arith.constant 0 : i32
    %c0_i32_0 = arith.constant 0 : i32
    return %arg0, %c0_i32 : i32, i32
  }
  func.func @transform_1(%arg0: i32, %arg1: i32) -> (i32, i32) {
    %c0_i32 = arith.constant 0 : i32
    %c0_i32_0 = arith.constant 0 : i32
    return %c0_i32, %arg1 : i32, i32
  }
  func.func @transform_2(%arg0: i32, %arg1: i32) -> (i32, i32) {
    %c0_i32 = arith.constant 0 : i32
    %c0_i32_0 = arith.constant 0 : i32
    return %c0_i32, %arg1 : i32, i32
  }
  func.func @transform_3(%arg0: i32, %arg1: i32) -> (i32, i32) {
    %c0_i32 = arith.constant 0 : i32
    %c0_i32_0 = arith.constant 0 : i32
    return %c0_i32, %arg1 : i32, i32
  }
  func.func @transform_4(%arg0: i32, %arg1: i32) -> (i32, i32) {
    %c0_i32 = arith.constant 0 : i32
    %c0_i32_0 = arith.constant 0 : i32
    return %c0_i32, %arg1 : i32, i32
  }
  func.func @transform_5(%arg0: i32, %arg1: i32) -> (i32, i32) {
    %c0_i32 = arith.constant 0 : i32
    %c0_i32_0 = arith.constant 0 : i32
    return %arg1, %c0_i32 : i32, i32
  }
  func.func @transform_6(%arg0: i32, %arg1: i32) -> (i32, i32) {
    %c0_i32 = arith.constant 0 : i32
    %c0_i32_0 = arith.constant 0 : i32
    %c0_i32_1 = arith.constant 0 : i32
    return %c0_i32, %c0_i32_0 : i32, i32
  }
  func.func @transform_7(%arg0: i32, %arg1: i32) -> (i32, i32) {
    %c0_i32 = arith.constant 0 : i32
    %c0_i32_0 = arith.constant 0 : i32
    return %arg0, %c0_i32 : i32, i32
  }
}

module attributes {stable_mosaic.version = 11 : i64} {
  func.func @_ffn_geglu_kernel(%arg0: i32, %arg1: i32, %arg2: memref<16x32xf32, #tpu.memory_space<vmem>>, %arg3: memref<32x128xf32, #tpu.memory_space<vmem>>, %arg4: memref<32x128xf32, #tpu.memory_space<vmem>>, %arg5: memref<1x128xf32, #tpu.memory_space<vmem>>, %arg6: memref<1x128xf32, #tpu.memory_space<vmem>>, %arg7: memref<128x32xf32, #tpu.memory_space<vmem>>, %arg8: memref<1x32xf32, #tpu.memory_space<vmem>>, %arg9: memref<16x32xf32, #tpu.memory_space<vmem>>, %arg10: memref<16x32xf32, #tpu.memory_space<vmem>>) attributes {dimension_semantics = [#tpu.dimension_semantics<parallel>, #tpu.dimension_semantics<arbitrary>], iteration_bounds = array<i64: 1, 1>, scalar_prefetch = 0 : i64, scratch_operands = 1 : i64, tpu.core_type = #tpu.core_type<tc>, window_params = [{transform_indices = @transform_0, window_bounds = array<i64: 16, 32>}, {transform_indices = @transform_1, window_bounds = array<i64: 32, 128>}, {transform_indices = @transform_2, window_bounds = array<i64: 32, 128>}, {transform_indices = @transform_3, window_bounds = array<i64: 1, 128>}, {transform_indices = @transform_4, window_bounds = array<i64: 1, 128>}, {transform_indices = @transform_5, window_bounds = array<i64: 128, 32>}, {pipeline_mode = #tpu.pipeline_mode<synchronous>, transform_indices = @transform_6, window_bounds = array<i64: 1, 32>}, {transform_indices = @transform_7, window_bounds = array<i64: 16, 32>}]} {
    %c0_i32 = arith.constant 0 : i32
    %0 = arith.cmpi eq, %arg1, %c0_i32 : i32
    %1 = arith.extui %0 : i1 to i32
    %c0_i32_0 = arith.constant 0 : i32
    %2 = arith.cmpi ne, %1, %c0_i32_0 : i32
    scf.if %2 {
      %cst_34 = arith.constant 0.000000e+00 : f32
      %62 = vector.broadcast %cst_34 : f32 to vector<16x32xf32>
      %c0_35 = arith.constant 0 : index
      %c0_36 = arith.constant 0 : index
      %63 = vector.load %arg10[%c0_35, %c0_36] : memref<16x32xf32, #tpu.memory_space<vmem>>, vector<16x32xf32>
      tpu.vector_store %arg10[%c0_35, %c0_36], %62 {strides = array<i32>} : memref<16x32xf32, #tpu.memory_space<vmem>>, vector<16x32xf32>,
    } else {
    }
    %c0 = arith.constant 0 : index
    %c0_1 = arith.constant 0 : index
    %3 = vector.load %arg2[%c0, %c0_1] : memref<16x32xf32, #tpu.memory_space<vmem>>, vector<16x32xf32>
    %c0_2 = arith.constant 0 : index
    %c0_3 = arith.constant 0 : index
    %4 = vector.load %arg3[%c0_2, %c0_3] : memref<32x128xf32, #tpu.memory_space<vmem>>, vector<32x128xf32>
    %cst = arith.constant dense<0.000000e+00> : vector<16x128xf32>
    %5 = tpu.matmul %3, %4, %cst {dimension_numbers = #tpu.dot_dimension_numbers<[1], [0], [0], [1], [0, 0, 1, 1], [], []>} : vector<16x32xf32>, vector<32x128xf32>, vector<16x128xf32> -> vector<16x128xf32>
    %c0_4 = arith.constant 0 : index
    %c0_5 = arith.constant 0 : index
    %6 = vector.load %arg5[%c0_4, %c0_5] : memref<1x128xf32, #tpu.memory_space<vmem>>, vector<1x128xf32>
    %7 = vector.broadcast %6 : vector<1x128xf32> to vector<16x128xf32>
    %8 = arith.addf %5, %7 : vector<16x128xf32>
    %c0_6 = arith.constant 0 : index
    %c0_7 = arith.constant 0 : index
    %9 = vector.load %arg4[%c0_6, %c0_7] : memref<32x128xf32, #tpu.memory_space<vmem>>, vector<32x128xf32>
    %cst_8 = arith.constant dense<0.000000e+00> : vector<16x128xf32>
    %10 = tpu.matmul %3, %9, %cst_8 {dimension_numbers = #tpu.dot_dimension_numbers<[1], [0], [0], [1], [0, 0, 1, 1], [], []>} : vector<16x32xf32>, vector<32x128xf32>, vector<16x128xf32> -> vector<16x128xf32>
    %c0_9 = arith.constant 0 : index
    %c0_10 = arith.constant 0 : index
    %11 = vector.load %arg6[%c0_9, %c0_10] : memref<1x128xf32, #tpu.memory_space<vmem>>, vector<1x128xf32>
    %12 = vector.broadcast %11 : vector<1x128xf32> to vector<16x128xf32>
    %13 = arith.addf %10, %12 : vector<16x128xf32>
    %cst_11 = arith.constant 5.000000e-01 : f32
    %14 = vector.broadcast %cst_11 : f32 to vector<16x128xf32>
    %15 = arith.mulf %14, %13 : vector<16x128xf32>
    %cst_12 = arith.constant 0.707106769 : f32
    %16 = vector.broadcast %cst_12 : f32 to vector<16x128xf32>
    %17 = arith.mulf %13, %16 : vector<16x128xf32>
    %18 = math.absf %17 : vector<16x128xf32>
    %cst_13 = arith.constant 0.327591091 : f32
    %19 = vector.broadcast %cst_13 : f32 to vector<16x128xf32>
    %20 = arith.mulf %19, %18 : vector<16x128xf32>
    %cst_14 = arith.constant 1.000000e+00 : f32
    %21 = vector.broadcast %cst_14 : f32 to vector<16x128xf32>
    %22 = arith.addf %21, %20 : vector<16x128xf32>
    %23 = tpu.reciprocal %22 {approx = true} : vector<16x128xf32> -> vector<16x128xf32>
    %cst_15 = arith.constant 1.06140542 : f32
    %24 = vector.broadcast %cst_15 : f32 to vector<16x128xf32>
    %25 = arith.mulf %24, %23 : vector<16x128xf32>
    %cst_16 = arith.constant -1.45315206 : f32
    %26 = vector.broadcast %cst_16 : f32 to vector<16x128xf32>
    %27 = arith.addf %25, %26 : vector<16x128xf32>
    %28 = arith.mulf %27, %23 : vector<16x128xf32>
    %cst_17 = arith.constant 1.42141378 : f32
    %29 = vector.broadcast %cst_17 : f32 to vector<16x128xf32>
    %30 = arith.addf %28, %29 : vector<16x128xf32>
    %31 = arith.mulf %30, %23 : vector<16x128xf32>
    %cst_18 = arith.constant -0.284496725 : f32
    %32 = vector.broadcast %cst_18 : f32 to vector<16x128xf32>
    %33 = arith.addf %31, %32 : vector<16x128xf32>
    %34 = arith.mulf %33, %23 : vector<16x128xf32>
    %cst_19 = arith.constant 0.254829586 : f32
    %35 = vector.broadcast %cst_19 : f32 to vector<16x128xf32>
    %36 = arith.addf %34, %35 : vector<16x128xf32>
    %37 = arith.mulf %36, %23 : vector<16x128xf32>
    %cst_20 = arith.constant 0.000000e+00 : f32
    %38 = vector.broadcast %cst_20 : f32 to vector<16x128xf32>
    %39 = arith.subf %38, %18 : vector<16x128xf32>
    %40 = arith.mulf %39, %18 : vector<16x128xf32>
    %41 = math.exp %40 : vector<16x128xf32>
    %42 = arith.mulf %37, %41 : vector<16x128xf32>
    %cst_21 = arith.constant 1.000000e+00 : f32
    %43 = vector.broadcast %cst_21 : f32 to vector<16x128xf32>
    %44 = arith.subf %43, %42 : vector<16x128xf32>
    %cst_22 = arith.constant 0.000000e+00 : f32
    %45 = vector.broadcast %cst_22 : f32 to vector<16x128xf32>
    %46 = arith.cmpf olt, %17, %45 : vector<16x128xf32>
    %cst_23 = arith.constant 0.000000e+00 : f32
    %47 = vector.broadcast %cst_23 : f32 to vector<16x128xf32>
    %48 = arith.subf %47, %44 : vector<16x128xf32>
    %49 = arith.select %46, %48, %44 : vector<16x128xi1>, vector<16x128xf32>
    %cst_24 = arith.constant 1.000000e+00 : f32
    %50 = vector.broadcast %cst_24 : f32 to vector<16x128xf32>
    %51 = arith.addf %50, %49 : vector<16x128xf32>
    %52 = arith.mulf %15, %51 : vector<16x128xf32>
    %53 = arith.mulf %52, %8 : vector<16x128xf32>
    %c0_25 = arith.constant 0 : index
    %c0_26 = arith.constant 0 : index
    %54 = vector.load %arg10[%c0_25, %c0_26] : memref<16x32xf32, #tpu.memory_space<vmem>>, vector<16x32xf32>
    %c0_27 = arith.constant 0 : index
    %c0_28 = arith.constant 0 : index
    %55 = vector.load %arg7[%c0_27, %c0_28] : memref<128x32xf32, #tpu.memory_space<vmem>>, vector<128x32xf32>
    %cst_29 = arith.constant dense<0.000000e+00> : vector<16x32xf32>
    %56 = tpu.matmul %53, %55, %cst_29 {dimension_numbers = #tpu.dot_dimension_numbers<[1], [0], [0], [1], [0, 0, 1, 1], [], []>} : vector<16x128xf32>, vector<128x32xf32>, vector<16x32xf32> -> vector<16x32xf32>
    %57 = arith.addf %54, %56 : vector<16x32xf32>
    %c0_30 = arith.constant 0 : index
    %c0_31 = arith.constant 0 : index
    %58 = vector.load %arg10[%c0_30, %c0_31] : memref<16x32xf32, #tpu.memory_space<vmem>>, vector<16x32xf32>
    tpu.vector_store %arg10[%c0_30, %c0_31], %57 {strides = array<i32>} : memref<16x32xf32, #tpu.memory_space<vmem>>, vector<16x32xf32>,
    %c0_i32_32 = arith.constant 0 : i32
    %59 = arith.cmpi eq, %arg1, %c0_i32_32 : i32
    %60 = arith.extui %59 : i1 to i32
    %c0_i32_33 = arith.constant 0 : i32
    %61 = arith.cmpi ne, %60, %c0_i32_33 : i32
    scf.if %61 {
      %c0_34 = arith.constant 0 : index
      %c0_35 = arith.constant 0 : index
      %62 = vector.load %arg10[%c0_34, %c0_35] : memref<16x32xf32, #tpu.memory_space<vmem>>, vector<16x32xf32>
      %c0_36 = arith.constant 0 : index
      %c0_37 = arith.constant 0 : index
      %63 = vector.load %arg8[%c0_36, %c0_37] : memref<1x32xf32, #tpu.memory_space<vmem>>, vector<1x32xf32>
      %64 = vector.broadcast %63 : vector<1x32xf32> to vector<16x32xf32>
      %65 = arith.addf %62, %64 : vector<16x32xf32>
      %c0_38 = arith.constant 0 : index
      %c0_39 = arith.constant 0 : index
      %66 = vector.load %arg9[%c0_38, %c0_39] : memref<16x32xf32, #tpu.memory_space<vmem>>, vector<16x32xf32>
      tpu.vector_store %arg9[%c0_38, %c0_39], %65 {strides = array<i32>} : memref<16x32xf32, #tpu.memory_space<vmem>>, vector<16x32xf32>,
    } else {
    }
    return
  }
  func.func @transform_0(%arg0: i32, %arg1: i32) -> (i32, i32) {
    %c0_i32 = arith.constant 0 : i32
    %c0_i32_0 = arith.constant 0 : i32
    return %arg0, %c0_i32 : i32, i32
  }
  func.func @transform_1(%arg0: i32, %arg1: i32) -> (i32, i32) {
    %c0_i32 = arith.constant 0 : i32
    %c0_i32_0 = arith.constant 0 : i32
    return %c0_i32, %arg1 : i32, i32
  }
  func.func @transform_2(%arg0: i32, %arg1: i32) -> (i32, i32) {
    %c0_i32 = arith.constant 0 : i32
    %c0_i32_0 = arith.constant 0 : i32
    return %c0_i32, %arg1 : i32, i32
  }
  func.func @transform_3(%arg0: i32, %arg1: i32) -> (i32, i32) {
    %c0_i32 = arith.constant 0 : i32
    %c0_i32_0 = arith.constant 0 : i32
    return %c0_i32, %arg1 : i32, i32
  }
  func.func @transform_4(%arg0: i32, %arg1: i32) -> (i32, i32) {
    %c0_i32 = arith.constant 0 : i32
    %c0_i32_0 = arith.constant 0 : i32
    return %c0_i32, %arg1 : i32, i32
  }
  func.func @transform_5(%arg0: i32, %arg1: i32) -> (i32, i32) {
    %c0_i32 = arith.constant 0 : i32
    %c0_i32_0 = arith.constant 0 : i32
    return %arg1, %c0_i32 : i32, i32
  }
  func.func @transform_6(%arg0: i32, %arg1: i32) -> (i32, i32) {
    %c0_i32 = arith.constant 0 : i32
    %c0_i32_0 = arith.constant 0 : i32
    %c0_i32_1 = arith.constant 0 : i32
    return %c0_i32, %c0_i32_0 : i32, i32
  }
  func.func @transform_7(%arg0: i32, %arg1: i32) -> (i32, i32) {
    %c0_i32 = arith.constant 0 : i32
    %c0_i32_0 = arith.constant 0 : i32
    return %arg0, %c0_i32 : i32, i32
  }
}

module attributes {stable_mosaic.version = 11 : i64} {
  func.func @_ffn_geglu_kernel(%arg0: i32, %arg1: i32, %arg2: memref<16x32xf32, #tpu.memory_space<vmem>>, %arg3: memref<32x128xf32, #tpu.memory_space<vmem>>, %arg4: memref<32x128xf32, #tpu.memory_space<vmem>>, %arg5: memref<1x128xf32, #tpu.memory_space<vmem>>, %arg6: memref<1x128xf32, #tpu.memory_space<vmem>>, %arg7: memref<128x32xf32, #tpu.memory_space<vmem>>, %arg8: memref<1x32xf32, #tpu.memory_space<vmem>>, %arg9: memref<16x32xf32, #tpu.memory_space<vmem>>, %arg10: memref<16x32xf32, #tpu.memory_space<vmem>>) attributes {dimension_semantics = [#tpu.dimension_semantics<parallel>, #tpu.dimension_semantics<arbitrary>], iteration_bounds = array<i64: 1, 1>, scalar_prefetch = 0 : i64, scratch_operands = 1 : i64, tpu.core_type = #tpu.core_type<tc>, window_params = [{transform_indices = @transform_0, window_bounds = array<i64: 16, 32>}, {transform_indices = @transform_1, window_bounds = array<i64: 32, 128>}, {transform_indices = @transform_2, window_bounds = array<i64: 32, 128>}, {transform_indices = @transform_3, window_bounds = array<i64: 1, 128>}, {transform_indices = @transform_4, window_bounds = array<i64: 1, 128>}, {transform_indices = @transform_5, window_bounds = array<i64: 128, 32>}, {pipeline_mode = #tpu.pipeline_mode<synchronous>, transform_indices = @transform_6, window_bounds = array<i64: 1, 32>}, {transform_indices = @transform_7, window_bounds = array<i64: 16, 32>}]} {
    %c0_i32 = arith.constant 0 : i32
    %0 = arith.cmpi eq, %arg1, %c0_i32 : i32
    %1 = arith.extui %0 : i1 to i32
    %c0_i32_0 = arith.constant 0 : i32
    %2 = arith.cmpi ne, %1, %c0_i32_0 : i32
    scf.if %2 {
      %cst_34 = arith.constant 0.000000e+00 : f32
      %62 = vector.broadcast %cst_34 : f32 to vector<16x32xf32>
      %c0_35 = arith.constant 0 : index
      %c0_36 = arith.constant 0 : index
      %63 = vector.load %arg10[%c0_35, %c0_36] : memref<16x32xf32, #tpu.memory_space<vmem>>, vector<16x32xf32>
      tpu.vector_store %arg10[%c0_35, %c0_36], %62 {strides = array<i32>} : memref<16x32xf32, #tpu.memory_space<vmem>>, vector<16x32xf32>,
    } else {
    }
    %c0 = arith.constant 0 : index
    %c0_1 = arith.constant 0 : index
    %3 = vector.load %arg2[%c0, %c0_1] : memref<16x32xf32, #tpu.memory_space<vmem>>, vector<16x32xf32>
    %c0_2 = arith.constant 0 : index
    %c0_3 = arith.constant 0 : index
    %4 = vector.load %arg3[%c0_2, %c0_3] : memref<32x128xf32, #tpu.memory_space<vmem>>, vector<32x128xf32>
    %cst = arith.constant dense<0.000000e+00> : vector<16x128xf32>
    %5 = tpu.matmul %3, %4, %cst {dimension_numbers = #tpu.dot_dimension_numbers<[1], [0], [0], [1], [0, 0, 1, 1], [], []>} : vector<16x32xf32>, vector<32x128xf32>, vector<16x128xf32> -> vector<16x128xf32>
    %c0_4 = arith.constant 0 : index
    %c0_5 = arith.constant 0 : index
    %6 = vector.load %arg5[%c0_4, %c0_5] : memref<1x128xf32, #tpu.memory_space<vmem>>, vector<1x128xf32>
    %7 = vector.broadcast %6 : vector<1x128xf32> to vector<16x128xf32>
    %8 = arith.addf %5, %7 : vector<16x128xf32>
    %c0_6 = arith.constant 0 : index
    %c0_7 = arith.constant 0 : index
    %9 = vector.load %arg4[%c0_6, %c0_7] : memref<32x128xf32, #tpu.memory_space<vmem>>, vector<32x128xf32>
    %cst_8 = arith.constant dense<0.000000e+00> : vector<16x128xf32>
    %10 = tpu.matmul %3, %9, %cst_8 {dimension_numbers = #tpu.dot_dimension_numbers<[1], [0], [0], [1], [0, 0, 1, 1], [], []>} : vector<16x32xf32>, vector<32x128xf32>, vector<16x128xf32> -> vector<16x128xf32>
    %c0_9 = arith.constant 0 : index
    %c0_10 = arith.constant 0 : index
    %11 = vector.load %arg6[%c0_9, %c0_10] : memref<1x128xf32, #tpu.memory_space<vmem>>, vector<1x128xf32>
    %12 = vector.broadcast %11 : vector<1x128xf32> to vector<16x128xf32>
    %13 = arith.addf %10, %12 : vector<16x128xf32>
    %cst_11 = arith.constant 5.000000e-01 : f32
    %14 = vector.broadcast %cst_11 : f32 to vector<16x128xf32>
    %15 = arith.mulf %14, %13 : vector<16x128xf32>
    %cst_12 = arith.constant 0.707106769 : f32
    %16 = vector.broadcast %cst_12 : f32 to vector<16x128xf32>
    %17 = arith.mulf %13, %16 : vector<16x128xf32>
    %18 = math.absf %17 : vector<16x128xf32>
    %cst_13 = arith.constant 0.327591091 : f32
    %19 = vector.broadcast %cst_13 : f32 to vector<16x128xf32>
    %20 = arith.mulf %19, %18 : vector<16x128xf32>
    %cst_14 = arith.constant 1.000000e+00 : f32
    %21 = vector.broadcast %cst_14 : f32 to vector<16x128xf32>
    %22 = arith.addf %21, %20 : vector<16x128xf32>
    %23 = tpu.reciprocal %22 {approx = true} : vector<16x128xf32> -> vector<16x128xf32>
    %cst_15 = arith.constant 1.06140542 : f32
    %24 = vector.broadcast %cst_15 : f32 to vector<16x128xf32>
    %25 = arith.mulf %24, %23 : vector<16x128xf32>
    %cst_16 = arith.constant -1.45315206 : f32
    %26 = vector.broadcast %cst_16 : f32 to vector<16x128xf32>
    %27 = arith.addf %25, %26 : vector<16x128xf32>
    %28 = arith.mulf %27, %23 : vector<16x128xf32>
    %cst_17 = arith.constant 1.42141378 : f32
    %29 = vector.broadcast %cst_17 : f32 to vector<16x128xf32>
    %30 = arith.addf %28, %29 : vector<16x128xf32>
    %31 = arith.mulf %30, %23 : vector<16x128xf32>
    %cst_18 = arith.constant -0.284496725 : f32
    %32 = vector.broadcast %cst_18 : f32 to vector<16x128xf32>
    %33 = arith.addf %31, %32 : vector<16x128xf32>
    %34 = arith.mulf %33, %23 : vector<16x128xf32>
    %cst_19 = arith.constant 0.254829586 : f32
    %35 = vector.broadcast %cst_19 : f32 to vector<16x128xf32>
    %36 = arith.addf %34, %35 : vector<16x128xf32>
    %37 = arith.mulf %36, %23 : vector<16x128xf32>
    %cst_20 = arith.constant 0.000000e+00 : f32
    %38 = vector.broadcast %cst_20 : f32 to vector<16x128xf32>
    %39 = arith.subf %38, %18 : vector<16x128xf32>
    %40 = arith.mulf %39, %18 : vector<16x128xf32>
    %41 = math.exp %40 : vector<16x128xf32>
    %42 = arith.mulf %37, %41 : vector<16x128xf32>
    %cst_21 = arith.constant 1.000000e+00 : f32
    %43 = vector.broadcast %cst_21 : f32 to vector<16x128xf32>
    %44 = arith.subf %43, %42 : vector<16x128xf32>
    %cst_22 = arith.constant 0.000000e+00 : f32
    %45 = vector.broadcast %cst_22 : f32 to vector<16x128xf32>
    %46 = arith.cmpf olt, %17, %45 : vector<16x128xf32>
    %cst_23 = arith.constant 0.000000e+00 : f32
    %47 = vector.broadcast %cst_23 : f32 to vector<16x128xf32>
    %48 = arith.subf %47, %44 : vector<16x128xf32>
    %49 = arith.select %46, %48, %44 : vector<16x128xi1>, vector<16x128xf32>
    %cst_24 = arith.constant 1.000000e+00 : f32
    %50 = vector.broadcast %cst_24 : f32 to vector<16x128xf32>
    %51 = arith.addf %50, %49 : vector<16x128xf32>
    %52 = arith.mulf %15, %51 : vector<16x128xf32>
    %53 = arith.mulf %52, %8 : vector<16x128xf32>
    %c0_25 = arith.constant 0 : index
    %c0_26 = arith.constant 0 : index
    %54 = vector.load %arg10[%c0_25, %c0_26] : memref<16x32xf32, #tpu.memory_space<vmem>>, vector<16x32xf32>
    %c0_27 = arith.constant 0 : index
    %c0_28 = arith.constant 0 : index
    %55 = vector.load %arg7[%c0_27, %c0_28] : memref<128x32xf32, #tpu.memory_space<vmem>>, vector<128x32xf32>
    %cst_29 = arith.constant dense<0.000000e+00> : vector<16x32xf32>
    %56 = tpu.matmul %53, %55, %cst_29 {dimension_numbers = #tpu.dot_dimension_numbers<[1], [0], [0], [1], [0, 0, 1, 1], [], []>} : vector<16x128xf32>, vector<128x32xf32>, vector<16x32xf32> -> vector<16x32xf32>
    %57 = arith.addf %54, %56 : vector<16x32xf32>
    %c0_30 = arith.constant 0 : index
    %c0_31 = arith.constant 0 : index
    %58 = vector.load %arg10[%c0_30, %c0_31] : memref<16x32xf32, #tpu.memory_space<vmem>>, vector<16x32xf32>
    tpu.vector_store %arg10[%c0_30, %c0_31], %57 {strides = array<i32>} : memref<16x32xf32, #tpu.memory_space<vmem>>, vector<16x32xf32>,
    %c0_i32_32 = arith.constant 0 : i32
    %59 = arith.cmpi eq, %arg1, %c0_i32_32 : i32
    %60 = arith.extui %59 : i1 to i32
    %c0_i32_33 = arith.constant 0 : i32
    %61 = arith.cmpi ne, %60, %c0_i32_33 : i32
    scf.if %61 {
      %c0_34 = arith.constant 0 : index
      %c0_35 = arith.constant 0 : index
      %62 = vector.load %arg10[%c0_34, %c0_35] : memref<16x32xf32, #tpu.memory_space<vmem>>, vector<16x32xf32>
      %c0_36 = arith.constant 0 : index
      %c0_37 = arith.constant 0 : index
      %63 = vector.load %arg8[%c0_36, %c0_37] : memref<1x32xf32, #tpu.memory_space<vmem>>, vector<1x32xf32>
      %64 = vector.broadcast %63 : vector<1x32xf32> to vector<16x32xf32>
      %65 = arith.addf %62, %64 : vector<16x32xf32>
      %c0_38 = arith.constant 0 : index
      %c0_39 = arith.constant 0 : index
      %66 = vector.load %arg9[%c0_38, %c0_39] : memref<16x32xf32, #tpu.memory_space<vmem>>, vector<16x32xf32>
      tpu.vector_store %arg9[%c0_38, %c0_39], %65 {strides = array<i32>} : memref<16x32xf32, #tpu.memory_space<vmem>>, vector<16x32xf32>,
    } else {
    }
    return
  }
  func.func @transform_0(%arg0: i32, %arg1: i32) -> (i32, i32) {
    %c0_i32 = arith.constant 0 : i32
    %c0_i32_0 = arith.constant 0 : i32
    return %arg0, %c0_i32 : i32, i32
  }
  func.func @transform_1(%arg0: i32, %arg1: i32) -> (i32, i32) {
    %c0_i32 = arith.constant 0 : i32
    %c0_i32_0 = arith.constant 0 : i32
    return %c0_i32, %arg1 : i32, i32
  }
  func.func @transform_2(%arg0: i32, %arg1: i32) -> (i32, i32) {
    %c0_i32 = arith.constant 0 : i32
    %c0_i32_0 = arith.constant 0 : i32
    return %c0_i32, %arg1 : i32, i32
  }
  func.func @transform_3(%arg0: i32, %arg1: i32) -> (i32, i32) {
    %c0_i32 = arith.constant 0 : i32
    %c0_i32_0 = arith.constant 0 : i32
    return %c0_i32, %arg1 : i32, i32
  }
  func.func @transform_4(%arg0: i32, %arg1: i32) -> (i32, i32) {
    %c0_i32 = arith.constant 0 : i32
    %c0_i32_0 = arith.constant 0 : i32
    return %c0_i32, %arg1 : i32, i32
  }
  func.func @transform_5(%arg0: i32, %arg1: i32) -> (i32, i32) {
    %c0_i32 = arith.constant 0 : i32
    %c0_i32_0 = arith.constant 0 : i32
    return %arg1, %c0_i32 : i32, i32
  }
  func.func @transform_6(%arg0: i32, %arg1: i32) -> (i32, i32) {
    %c0_i32 = arith.constant 0 : i32
    %c0_i32_0 = arith.constant 0 : i32
    %c0_i32_1 = arith.constant 0 : i32
    return %c0_i32, %c0_i32_0 : i32, i32
  }
  func.func @transform_7(%arg0: i32, %arg1: i32) -> (i32, i32) {
    %c0_i32 = arith.constant 0 : i32
    %c0_i32_0 = arith.constant 0 : i32
    return %arg0, %c0_i32 : i32, i32
  }
}

</mosaic_0001>

<llo_original>
// kernel: tpu_custom_call.1
$region0: #{tpu_custom_call.1}
  #allocation0 [shape = 'u32[]', space=smem, size = 0x4, offset = 0x4, fixed_abs, tag = 'smem constant byte address 0x4 - core index']
  #allocation1 [shape = 'u32[72,128]{1,0:T(1,128)}', space=vmem, size = 0x9000, scoped, tag = 'internal scratch']
  #allocation2 [shape = 'f32[16,32]{1,0:T(8,128)}', space=vmem, size = 0x2000, scoped, tag = 'scratch operand']
  %s0 = inlined_call_operand.vmem [shape: f32[16,32], index: 0, kind: input, shape index: {}]
  %s1 = inlined_call_operand.vmem [shape: f32[32,128], index: 1, kind: input, shape index: {}]
  %s2 = inlined_call_operand.vmem [shape: f32[32,128], index: 2, kind: input, shape index: {}]
  %s3 = inlined_call_operand.vmem [shape: f32[1,128], index: 3, kind: input, shape index: {}]
  %s4 = inlined_call_operand.vmem [shape: f32[1,128], index: 4, kind: input, shape index: {}]
  %s5 = inlined_call_operand.vmem [shape: f32[128,32], index: 5, kind: input, shape index: {}]
  %s6 = inlined_call_operand.vmem [shape: f32[1,32], index: 6, kind: input, shape index: {}]
  %s7 = inlined_call_operand.hbm [shape: f32[16,32], index: 7, kind: output, shape index: {}]
  %s8 = sld [smem:[#allocation0]]
  $region46: #{tpu_custom_call.1} parent=0
    _
  %s10 = ssub.s32 1, %s8
  %s11 = scalar_select 0, %s10, %s8
  $region1: #{tpu_custom_call.1} parent=0
    #allocation3 [shape = 'u8[8192]{0}', space=vmem, size = 0x2000, scoped, tag = 'output window, operand 0, single buffered']
    #allocation4 [shape = 's32[1]{0}', space=sflag, size = 0x4, scoped, tag = 'scoped memory for tpu_custom_call.1']
    %12 = vsyncpa [#allocation4], 0
    // Predicated region
    $region2: #{tpu_custom_call.1} parent=1 // pred_check
      _
    $region3: #{tpu_custom_call.1} parent=1 // pred_check_branch
      %14 = sbr.rel (0) target = $region5
    $region4: #{tpu_custom_call.1} parent=1 // pred_region
      _
    $region5: #{tpu_custom_call.1} parent=1 // pred_fallthru
      _
    // Predicated region
    $region6: #{tpu_custom_call.1} parent=1 // pred_check
      _
    $region7: #{tpu_custom_call.1} parent=1 // pred_check_branch
      %16 = sbr.rel (0) target = $region9
    $region8: #{tpu_custom_call.1} parent=1 // pred_region
      _
    $region9: #{tpu_custom_call.1} parent=1 // pred_fallthru
      _
    // Predicated region
    $region10: #{tpu_custom_call.1} parent=1 // pred_check
      _
    $region11: #{tpu_custom_call.1} parent=1 // pred_check_branch
      %18 = sbr.rel (0) target = $region13
    $region12: #{tpu_custom_call.1} parent=1 // pred_region
      _
    $region13: #{tpu_custom_call.1} parent=1 // pred_fallthru
      _
    // Predicated region
    $region14: #{tpu_custom_call.1} parent=1 // pred_check
      _
    $region15: #{tpu_custom_call.1} parent=1 // pred_check_branch
      %20 = sbr.rel (0) target = $region17
    $region16: #{tpu_custom_call.1} parent=1 // pred_region
      _
    $region17: #{tpu_custom_call.1} parent=1 // pred_fallthru
      _
    // Predicated region
    $region18: #{tpu_custom_call.1} parent=1 // pred_check
      _
    $region19: #{tpu_custom_call.1} parent=1 // pred_check_branch
      %22 = sbr.rel (0) target = $region21
    $region20: #{tpu_custom_call.1} parent=1 // pred_region
      _
    $region21: #{tpu_custom_call.1} parent=1 // pred_fallthru
      _
    // Predicated region
    $region22: #{tpu_custom_call.1} parent=1 // pred_check
      _
    $region23: #{tpu_custom_call.1} parent=1 // pred_check_branch
      %24 = sbr.rel (0) target = $region25
    $region24: #{tpu_custom_call.1} parent=1 // pred_region
      _
    $region25: #{tpu_custom_call.1} parent=1 // pred_fallthru
      _
    // Predicated region
    $region26: #{tpu_custom_call.1} parent=1 // pred_check
      _
    $region27: #{tpu_custom_call.1} parent=1 // pred_check_branch
      %26 = sbr.rel (0) target = $region29
    $region28: #{tpu_custom_call.1} parent=1 // pred_region
      _
    $region29: #{tpu_custom_call.1} parent=1 // pred_fallthru
      _
    %p27 = scmp.eq.s32.totalorder 0, 0
    // Predicated region
    $region30: #{tpu_custom_call.1} parent=1 // pred_check
      %p28 = pneg %p27
    $region31: #{tpu_custom_call.1} parent=1 // pred_check_branch
      %30 = sbr.rel (%p28) target = $region33
    $region32: #{tpu_custom_call.1} parent=1 // pred_region
      %vm31 = vcmask 261120
      %32 = vst.msk [vmem:[#allocation2] sm:$0xff] %vm31, 0.0
      %33 = vst.msk [vmem:[#allocation2 + $0x8] sm:$0xff] %vm31, 0.0
    $region33: #{tpu_custom_call.1} parent=1 // pred_fallthru
      _
    %v34 = vld [vmem:[%s0] sm:$0xff]
    %v35 = vld [vmem:[%s0 + $0x8] sm:$0xff]
    %v36 = vld [vmem:[%s1] sm:$0xff]
    %v37 = vld [vmem:[%s1 + $0x8] sm:$0xff]
    %v38 = vld [vmem:[%s1 + $0x10] sm:$0xff]
    %v39 = vld [vmem:[%s1 + $0x18] sm:$0xff]
    %v40 = vld [vmem:[%s3] sm:$0x1]
    %v42 = vperm.slane %v40, 0
    %vm44 = vcmask 261120
    %v46 = vsel %vm44, %v34, 0
    %v49 = vsel %vm44, %v35, 0
    %51 = vmatpush.msra.mxu0 0.0
    %52 = vmatpush.msra.mxu0 0.0
    %53 = vmatpush.msra.mxu0 0.0
    %54 = vmatpush.msra.mxu0 0.0
    %55 = vmatpush.msra.mxu0 0.0
    %56 = vmatpush.msra.mxu0 0.0
    %57 = vmatpush.msra.mxu0 0.0
    %58 = vmatpush.msra.mxu0 0.0
    %59 = vmatpush.msra.mxu0 0.0
    %60 = vmatpush.msra.mxu0 0.0
    %61 = vmatpush.msra.mxu0 0.0
    %62 = vmatpush.msra.mxu0 0.0
    %63 = vmatpush.msra.mxu0 %v39
    %64 = vmatpush.msra.mxu0 %v38
    %65 = vmatpush.msra.mxu0 %v37
    %66 = vmatpush.msra.mxu0 %v36
    %67 = vmatmul.f32.gmra.mxu0 %v46
    %v68 = vpop.f32.mrf.mxu0
    %v69 = vadd.f32 %v42, %v68
    %70 = vmatmul.f32.gmra.mxu0 %v49
    %v71 = vpop.f32.mrf.mxu0
    %v72 = vadd.f32 %v42, %v71
    %73 = vdwg.mxu0
    %v74 = vld [vmem:[%s2] sm:$0xff]
    %v75 = vld [vmem:[%s2 + $0x8] sm:$0xff]
    %v76 = vld [vmem:[%s2 + $0x10] sm:$0xff]
    %v77 = vld [vmem:[%s2 + $0x18] sm:$0xff]
    %v78 = vld [vmem:[%s4] sm:$0x1]
    %v80 = vperm.slane %v78, 0
    %82 = vmatpush.msra.mxu0 0.0
    %83 = vmatpush.msra.mxu0 0.0
    %84 = vmatpush.msra.mxu0 0.0
    %85 = vmatpush.msra.mxu0 0.0
    %86 = vmatpush.msra.mxu0 0.0
    %87 = vmatpush.msra.mxu0 0.0
    %88 = vmatpush.msra.mxu0 0.0
    %89 = vmatpush.msra.mxu0 0.0
    %90 = vmatpush.msra.mxu0 0.0
    %91 = vmatpush.msra.mxu0 0.0
    %92 = vmatpush.msra.mxu0 0.0
    %93 = vmatpush.msra.mxu0 0.0
    %94 = vmatpush.msra.mxu0 %v77
    %95 = vmatpush.msra.mxu0 %v76
    %96 = vmatpush.msra.mxu0 %v75
    %97 = vmatpush.msra.mxu0 %v74
    %98 = vmatmul.f32.gmra.mxu0 %v46
    %v99 = vpop.f32.mrf.mxu0
    %v100 = vadd.f32 %v80, %v99
    %101 = vmatmul.f32.gmra.mxu0 %v49
    %v102 = vpop.f32.mrf.mxu0
    %v103 = vadd.f32 %v80, %v102
    %104 = vdwg.mxu0
    %v105 = vmul.f32 %v100, 0.5
    %v106 = vmul.f32 %v103, 0.5
    %v107 = vmul.f32 %v100, 0.70710677
    %v108 = vmul.f32 %v103, 0.70710677
    %v109 = vand.u32 2147483647, %v107
    %v110 = vand.u32 2147483647, %v108
    %v111 = vmul.f32 %v109, 0.3275911
    %v112 = vmul.f32 %v110, 0.3275911
    %v113 = vadd.f32 %v111, 1.0
    %v114 = vadd.f32 %v112, 1.0
    %v115 = vrcp.pop %v113
    %v116 = vrcp.pop %v114
    %v117 = vmul.f32 %v115, 1.0614054
    %v118 = vmul.f32 %v116, 1.0614054
    %v119 = vadd.f32 %v117, -1.4531521
    %v120 = vadd.f32 %v118, -1.4531521
    %v121 = vmul.f32 %v119, %v115
    %v122 = vmul.f32 %v120, %v116
    %v123 = vadd.f32 %v121, 1.4214138
    %v124 = vadd.f32 %v122, 1.4214138
    %v125 = vmul.f32 %v123, %v115
    %v126 = vmul.f32 %v124, %v116
    %v127 = vadd.f32 %v125, -0.28449672
    %v128 = vadd.f32 %v126, -0.28449672
    %v129 = vmul.f32 %v127, %v115
    %v130 = vmul.f32 %v128, %v116
    %v131 = vadd.f32 %v129, 0.2548296
    %v132 = vadd.f32 %v130, 0.2548296
    %v133 = vmul.f32 %v131, %v115
    %v134 = vmul.f32 %v132, %v116
    %v135 = vsub.f32 0.0, %v109
    %v136 = vsub.f32 0.0, %v110
    %v137 = vmul.f32 %v135, %v109
    %v138 = vmul.f32 %v136, %v110
    %v139 = vmul.f32 %v137, 1.442695
    %v140 = vpow.pop %v139
    %v141 = vmul.f32 %v138, 1.442695
    %v142 = vpow.pop %v141
    %v143 = vmul.f32 %v133, %v140
    %v144 = vmul.f32 %v134, %v142
    %v145 = vsub.f32 1.0, %v143
    %v146 = vsub.f32 1.0, %v144
    %vm147 = vcmp.lt.f32.partialorder %v107, 0.0
    %vm148 = vcmp.lt.f32.partialorder %v108, 0.0
    %v149 = vsub.f32 0.0, %v145
    %v150 = vsub.f32 0.0, %v146
    %v151 = vsel %vm147, %v149, %v145
    %v152 = vsel %vm148, %v150, %v146
    %v153 = vadd.f32 %v151, 1.0
    %v154 = vadd.f32 %v152, 1.0
    %v155 = vmul.f32 %v105, %v153
    %v156 = vmul.f32 %v106, %v154
    %v157 = vmul.f32 %v155, %v69
    %v158 = vmul.f32 %v156, %v72
    %v159 = vld [vmem:[#allocation2] sm:$0xff]
    %v160 = vld [vmem:[#allocation2 + $0x8] sm:$0xff]
    %v161 = vld [vmem:[%s5] sm:$0xff]
    %v162 = vld [vmem:[%s5 + $0x8] sm:$0xff]
    %v163 = vld [vmem:[%s5 + $0x10] sm:$0xff]
    %v164 = vld [vmem:[%s5 + $0x18] sm:$0xff]
    %v165 = vld [vmem:[%s5 + $0x20] sm:$0xff]
    %v166 = vld [vmem:[%s5 + $0x28] sm:$0xff]
    %v167 = vld [vmem:[%s5 + $0x30] sm:$0xff]
    %v168 = vld [vmem:[%s5 + $0x38] sm:$0xff]
    %v169 = vld [vmem:[%s5 + $0x40] sm:$0xff]
    %v170 = vld [vmem:[%s5 + $0x48] sm:$0xff]
    %v171 = vld [vmem:[%s5 + $0x50] sm:$0xff]
    %v172 = vld [vmem:[%s5 + $0x58] sm:$0xff]
    %v173 = vld [vmem:[%s5 + $0x60] sm:$0xff]
    %v174 = vld [vmem:[%s5 + $0x68] sm:$0xff]
    %v175 = vld [vmem:[%s5 + $0x70] sm:$0xff]
    %v176 = vld [vmem:[%s5 + $0x78] sm:$0xff]
    %177 = vmatpush.msra.mxu0 %v176
    %178 = vmatpush.msra.mxu0 %v175
    %179 = vmatpush.msra.mxu0 %v174
    %180 = vmatpush.msra.mxu0 %v173
    %181 = vmatpush.msra.mxu0 %v172
    %182 = vmatpush.msra.mxu0 %v171
    %183 = vmatpush.msra.mxu0 %v170
    %184 = vmatpush.msra.mxu0 %v169
    %185 = vmatpush.msra.mxu0 %v168
    %186 = vmatpush.msra.mxu0 %v167
    %187 = vmatpush.msra.mxu0 %v166
    %188 = vmatpush.msra.mxu0 %v165
    %189 = vmatpush.msra.mxu0 %v164
    %190 = vmatpush.msra.mxu0 %v163
    %191 = vmatpush.msra.mxu0 %v162
    %192 = vmatpush.msra.mxu0 %v161
    %193 = vmatmul.f32.gmra.mxu0 %v157
    %v194 = vpop.f32.mrf.mxu0
    %v195 = vadd.f32 0.0, %v194
    %196 = vmatmul.f32.gmra.mxu0 %v158
    %v197 = vpop.f32.mrf.mxu0
    %v198 = vadd.f32 0.0, %v197
    %199 = vdwg.mxu0
    %v200 = vadd.f32 %v159, %v195
    %v201 = vadd.f32 %v160, %v198
    %202 = vst.msk [vmem:[#allocation2] sm:$0xff] %vm44, %v200
    %203 = vst.msk [vmem:[#allocation2 + $0x8] sm:$0xff] %vm44, %v201
    // Predicated region
    $region34: #{tpu_custom_call.1} parent=1 // pred_check
      %p204 = pneg %p27
    $region35: #{tpu_custom_call.1} parent=1 // pred_check_branch
      %206 = sbr.rel (%p204) target = $region37
    $region36: #{tpu_custom_call.1} parent=1 // pred_region
      %v207 = vld [vmem:[#allocation2] sm:$0xff]
      %v208 = vld [vmem:[#allocation2 + $0x8] sm:$0xff]
      %v209 = vld [vmem:[%s6] sm:$0x1]
      %v211 = vperm.slane %v209, 0
      %v213 = vadd.f32 %v207, %v211
      %v214 = vadd.f32 %v208, %v211
      %215 = vst.msk [vmem:[#allocation3] sm:$0xff] %vm44, %v213
      %216 = vst.msk [vmem:[#allocation3 + $0x8] sm:$0xff] %vm44, %v214
    $region37: #{tpu_custom_call.1} parent=1 // pred_fallthru
      _
    // Predicated region
    $region38: #{tpu_custom_call.1} parent=1 // pred_check
      _
    $region39: #{tpu_custom_call.1} parent=1 // pred_check_branch
      %218 = sbr.rel (0) target = $region41
    $region40: #{tpu_custom_call.1} parent=1 // pred_region
      %220 = vsyncadd [#allocation4], 0
      %s221 = sshll.u32 [#allocation3], 4
      %s222 = int_to_ptr.vmem [resolvable:$true] %s221
      %s223 = sshll.u32 %s7, 4
      %s224 = int_to_ptr.hbm [resolvable:$true] %s223
      %229 = dma.vmem_to_hbm [thread:$0]  %s222, 256, %s224, [#allocation4], 128, 128, 8
    $region41: #{tpu_custom_call.1} parent=1 // pred_fallthru
      _
    // Predicated region
    $region42: #{tpu_custom_call.1} parent=1 // pred_check
      _
    $region43: #{tpu_custom_call.1} parent=1 // pred_check_branch
      %231 = sbr.rel (0) target = $region45
    $region44: #{tpu_custom_call.1} parent=1 // pred_region
      %233 = dma.done [#allocation4], 256
    $region45: #{tpu_custom_call.1} parent=1 // pred_fallthru
      _
    %234 = vsyncpa [#allocation4], 1

// kernel: tpu_custom_call.1
$region0: #{tpu_custom_call.1}
  #allocation0 [shape = 'u32[]', space=smem, size = 0x4, offset = 0x4, fixed_abs, tag = 'smem constant byte address 0x4 - core index']
  #allocation1 [shape = 'u32[72,128]{1,0:T(1,128)}', space=vmem, size = 0x9000, scoped, tag = 'internal scratch']
  #allocation2 [shape = 'f32[16,32]{1,0:T(8,128)}', space=vmem, size = 0x2000, scoped, tag = 'scratch operand']
  %s0 = inlined_call_operand.vmem [shape: f32[16,32], index: 0, kind: input, shape index: {}]
  %s1 = inlined_call_operand.vmem [shape: f32[32,128], index: 1, kind: input, shape index: {}]
  %s2 = inlined_call_operand.vmem [shape: f32[32,128], index: 2, kind: input, shape index: {}]
  %s3 = inlined_call_operand.vmem [shape: f32[1,128], index: 3, kind: input, shape index: {}]
  %s4 = inlined_call_operand.vmem [shape: f32[1,128], index: 4, kind: input, shape index: {}]
  %s5 = inlined_call_operand.vmem [shape: f32[128,32], index: 5, kind: input, shape index: {}]
  %s6 = inlined_call_operand.vmem [shape: f32[1,32], index: 6, kind: input, shape index: {}]
  %s7 = inlined_call_operand.hbm [shape: f32[16,32], index: 7, kind: output, shape index: {}]
  %s8 = sld [smem:[#allocation0]]
  $region46: #{tpu_custom_call.1} parent=0
    _
  %s10 = ssub.s32 1, %s8
  %s11 = scalar_select 0, %s10, %s8
  $region1: #{tpu_custom_call.1} parent=0
    #allocation3 [shape = 'u8[8192]{0}', space=vmem, size = 0x2000, scoped, tag = 'output window, operand 0, single buffered']
    #allocation4 [shape = 's32[1]{0}', space=sflag, size = 0x4, scoped, tag = 'scoped memory for tpu_custom_call.1']
    %12 = vsyncpa [#allocation4], 0
    // Predicated region
    $region2: #{tpu_custom_call.1} parent=1 // pred_check
      _
    $region3: #{tpu_custom_call.1} parent=1 // pred_check_branch
      %14 = sbr.rel (0) target = $region5
    $region4: #{tpu_custom_call.1} parent=1 // pred_region
      _
    $region5: #{tpu_custom_call.1} parent=1 // pred_fallthru
      _
    // Predicated region
    $region6: #{tpu_custom_call.1} parent=1 // pred_check
      _
    $region7: #{tpu_custom_call.1} parent=1 // pred_check_branch
      %16 = sbr.rel (0) target = $region9
    $region8: #{tpu_custom_call.1} parent=1 // pred_region
      _
    $region9: #{tpu_custom_call.1} parent=1 // pred_fallthru
      _
    // Predicated region
    $region10: #{tpu_custom_call.1} parent=1 // pred_check
      _
    $region11: #{tpu_custom_call.1} parent=1 // pred_check_branch
      %18 = sbr.rel (0) target = $region13
    $region12: #{tpu_custom_call.1} parent=1 // pred_region
      _
    $region13: #{tpu_custom_call.1} parent=1 // pred_fallthru
      _
    // Predicated region
    $region14: #{tpu_custom_call.1} parent=1 // pred_check
      _
    $region15: #{tpu_custom_call.1} parent=1 // pred_check_branch
      %20 = sbr.rel (0) target = $region17
    $region16: #{tpu_custom_call.1} parent=1 // pred_region
      _
    $region17: #{tpu_custom_call.1} parent=1 // pred_fallthru
      _
    // Predicated region
    $region18: #{tpu_custom_call.1} parent=1 // pred_check
      _
    $region19: #{tpu_custom_call.1} parent=1 // pred_check_branch
      %22 = sbr.rel (0) target = $region21
    $region20: #{tpu_custom_call.1} parent=1 // pred_region
      _
    $region21: #{tpu_custom_call.1} parent=1 // pred_fallthru
      _
    // Predicated region
    $region22: #{tpu_custom_call.1} parent=1 // pred_check
      _
    $region23: #{tpu_custom_call.1} parent=1 // pred_check_branch
      %24 = sbr.rel (0) target = $region25
    $region24: #{tpu_custom_call.1} parent=1 // pred_region
      _
    $region25: #{tpu_custom_call.1} parent=1 // pred_fallthru
      _
    // Predicated region
    $region26: #{tpu_custom_call.1} parent=1 // pred_check
      _
    $region27: #{tpu_custom_call.1} parent=1 // pred_check_branch
      %26 = sbr.rel (0) target = $region29
    $region28: #{tpu_custom_call.1} parent=1 // pred_region
      _
    $region29: #{tpu_custom_call.1} parent=1 // pred_fallthru
      _
    %p27 = scmp.eq.s32.totalorder 0, 0
    // Predicated region
    $region30: #{tpu_custom_call.1} parent=1 // pred_check
      %p28 = pneg %p27
    $region31: #{tpu_custom_call.1} parent=1 // pred_check_branch
      %30 = sbr.rel (%p28) target = $region33
    $region32: #{tpu_custom_call.1} parent=1 // pred_region
      %vm31 = vcmask 261120
      %32 = vst.msk [vmem:[#allocation2] sm:$0xff] %vm31, 0.0
      %33 = vst.msk [vmem:[#allocation2 + $0x8] sm:$0xff] %vm31, 0.0
    $region33: #{tpu_custom_call.1} parent=1 // pred_fallthru
      _
    %v34 = vld [vmem:[%s0] sm:$0xff]
    %v35 = vld [vmem:[%s0 + $0x8] sm:$0xff]
    %v36 = vld [vmem:[%s1] sm:$0xff]
    %v37 = vld [vmem:[%s1 + $0x8] sm:$0xff]
    %v38 = vld [vmem:[%s1 + $0x10] sm:$0xff]
    %v39 = vld [vmem:[%s1 + $0x18] sm:$0xff]
    %v40 = vld [vmem:[%s3] sm:$0x1]
    %v42 = vperm.slane %v40, 0
    %vm44 = vcmask 261120
    %v46 = vsel %vm44, %v34, 0
    %v49 = vsel %vm44, %v35, 0
    %51 = vmatpush.msra.mxu0 0.0
    %52 = vmatpush.msra.mxu0 0.0
    %53 = vmatpush.msra.mxu0 0.0
    %54 = vmatpush.msra.mxu0 0.0
    %55 = vmatpush.msra.mxu0 0.0
    %56 = vmatpush.msra.mxu0 0.0
    %57 = vmatpush.msra.mxu0 0.0
    %58 = vmatpush.msra.mxu0 0.0
    %59 = vmatpush.msra.mxu0 0.0
    %60 = vmatpush.msra.mxu0 0.0
    %61 = vmatpush.msra.mxu0 0.0
    %62 = vmatpush.msra.mxu0 0.0
    %63 = vmatpush.msra.mxu0 %v39
    %64 = vmatpush.msra.mxu0 %v38
    %65 = vmatpush.msra.mxu0 %v37
    %66 = vmatpush.msra.mxu0 %v36
    %67 = vmatmul.f32.gmra.mxu0 %v46
    %v68 = vpop.f32.mrf.mxu0
    %v69 = vadd.f32 %v42, %v68
    %70 = vmatmul.f32.gmra.mxu0 %v49
    %v71 = vpop.f32.mrf.mxu0
    %v72 = vadd.f32 %v42, %v71
    %73 = vdwg.mxu0
    %v74 = vld [vmem:[%s2] sm:$0xff]
    %v75 = vld [vmem:[%s2 + $0x8] sm:$0xff]
    %v76 = vld [vmem:[%s2 + $0x10] sm:$0xff]
    %v77 = vld [vmem:[%s2 + $0x18] sm:$0xff]
    %v78 = vld [vmem:[%s4] sm:$0x1]
    %v80 = vperm.slane %v78, 0
    %82 = vmatpush.msra.mxu0 0.0
    %83 = vmatpush.msra.mxu0 0.0
    %84 = vmatpush.msra.mxu0 0.0
    %85 = vmatpush.msra.mxu0 0.0
    %86 = vmatpush.msra.mxu0 0.0
    %87 = vmatpush.msra.mxu0 0.0
    %88 = vmatpush.msra.mxu0 0.0
    %89 = vmatpush.msra.mxu0 0.0
    %90 = vmatpush.msra.mxu0 0.0
    %91 = vmatpush.msra.mxu0 0.0
    %92 = vmatpush.msra.mxu0 0.0
    %93 = vmatpush.msra.mxu0 0.0
    %94 = vmatpush.msra.mxu0 %v77
    %95 = vmatpush.msra.mxu0 %v76
    %96 = vmatpush.msra.mxu0 %v75
    %97 = vmatpush.msra.mxu0 %v74
    %98 = vmatmul.f32.gmra.mxu0 %v46
    %v99 = vpop.f32.mrf.mxu0
    %v100 = vadd.f32 %v80, %v99
    %101 = vmatmul.f32.gmra.mxu0 %v49
    %v102 = vpop.f32.mrf.mxu0
    %v103 = vadd.f32 %v80, %v102
    %104 = vdwg.mxu0
    %v105 = vmul.f32 %v100, 0.5
    %v106 = vmul.f32 %v103, 0.5
    %v107 = vmul.f32 %v100, 0.70710677
    %v108 = vmul.f32 %v103, 0.70710677
    %v109 = vand.u32 2147483647, %v107
    %v110 = vand.u32 2147483647, %v108
    %v111 = vmul.f32 %v109, 0.3275911
    %v112 = vmul.f32 %v110, 0.3275911
    %v113 = vadd.f32 %v111, 1.0
    %v114 = vadd.f32 %v112, 1.0
    %v115 = vrcp.pop %v113
    %v116 = vrcp.pop %v114
    %v117 = vmul.f32 %v115, 1.0614054
    %v118 = vmul.f32 %v116, 1.0614054
    %v119 = vadd.f32 %v117, -1.4531521
    %v120 = vadd.f32 %v118, -1.4531521
    %v121 = vmul.f32 %v119, %v115
    %v122 = vmul.f32 %v120, %v116
    %v123 = vadd.f32 %v121, 1.4214138
    %v124 = vadd.f32 %v122, 1.4214138
    %v125 = vmul.f32 %v123, %v115
    %v126 = vmul.f32 %v124, %v116
    %v127 = vadd.f32 %v125, -0.28449672
    %v128 = vadd.f32 %v126, -0.28449672
    %v129 = vmul.f32 %v127, %v115
    %v130 = vmul.f32 %v128, %v116
    %v131 = vadd.f32 %v129, 0.2548296
    %v132 = vadd.f32 %v130, 0.2548296
    %v133 = vmul.f32 %v131, %v115
    %v134 = vmul.f32 %v132, %v116
    %v135 = vsub.f32 0.0, %v109
    %v136 = vsub.f32 0.0, %v110
    %v137 = vmul.f32 %v135, %v109
    %v138 = vmul.f32 %v136, %v110
    %v139 = vmul.f32 %v137, 1.442695
    %v140 = vpow.pop %v139
    %v141 = vmul.f32 %v138, 1.442695
    %v142 = vpow.pop %v141
    %v143 = vmul.f32 %v133, %v140
    %v144 = vmul.f32 %v134, %v142
    %v145 = vsub.f32 1.0, %v143
    %v146 = vsub.f32 1.0, %v144
    %vm147 = vcmp.lt.f32.partialorder %v107, 0.0
    %vm148 = vcmp.lt.f32.partialorder %v108, 0.0
    %v149 = vsub.f32 0.0, %v145
    %v150 = vsub.f32 0.0, %v146
    %v151 = vsel %vm147, %v149, %v145
    %v152 = vsel %vm148, %v150, %v146
    %v153 = vadd.f32 %v151, 1.0
    %v154 = vadd.f32 %v152, 1.0
    %v155 = vmul.f32 %v105, %v153
    %v156 = vmul.f32 %v106, %v154
    %v157 = vmul.f32 %v155, %v69
    %v158 = vmul.f32 %v156, %v72
    %v159 = vld [vmem:[#allocation2] sm:$0xff]
    %v160 = vld [vmem:[#allocation2 + $0x8] sm:$0xff]
    %v161 = vld [vmem:[%s5] sm:$0xff]
    %v162 = vld [vmem:[%s5 + $0x8] sm:$0xff]
    %v163 = vld [vmem:[%s5 + $0x10] sm:$0xff]
    %v164 = vld [vmem:[%s5 + $0x18] sm:$0xff]
    %v165 = vld [vmem:[%s5 + $0x20] sm:$0xff]
    %v166 = vld [vmem:[%s5 + $0x28] sm:$0xff]
    %v167 = vld [vmem:[%s5 + $0x30] sm:$0xff]
    %v168 = vld [vmem:[%s5 + $0x38] sm:$0xff]
    %v169 = vld [vmem:[%s5 + $0x40] sm:$0xff]
    %v170 = vld [vmem:[%s5 + $0x48] sm:$0xff]
    %v171 = vld [vmem:[%s5 + $0x50] sm:$0xff]
    %v172 = vld [vmem:[%s5 + $0x58] sm:$0xff]
    %v173 = vld [vmem:[%s5 + $0x60] sm:$0xff]
    %v174 = vld [vmem:[%s5 + $0x68] sm:$0xff]
    %v175 = vld [vmem:[%s5 + $0x70] sm:$0xff]
    %v176 = vld [vmem:[%s5 + $0x78] sm:$0xff]
    %177 = vmatpush.msra.mxu0 %v176
    %178 = vmatpush.msra.mxu0 %v175
    %179 = vmatpush.msra.mxu0 %v174
    %180 = vmatpush.msra.mxu0 %v173
    %181 = vmatpush.msra.mxu0 %v172
    %182 = vmatpush.msra.mxu0 %v171
    %183 = vmatpush.msra.mxu0 %v170
    %184 = vmatpush.msra.mxu0 %v169
    %185 = vmatpush.msra.mxu0 %v168
    %186 = vmatpush.msra.mxu0 %v167
    %187 = vmatpush.msra.mxu0 %v166
    %188 = vmatpush.msra.mxu0 %v165
    %189 = vmatpush.msra.mxu0 %v164
    %190 = vmatpush.msra.mxu0 %v163
    %191 = vmatpush.msra.mxu0 %v162
    %192 = vmatpush.msra.mxu0 %v161
    %193 = vmatmul.f32.gmra.mxu0 %v157
    %v194 = vpop.f32.mrf.mxu0
    %v195 = vadd.f32 0.0, %v194
    %196 = vmatmul.f32.gmra.mxu0 %v158
    %v197 = vpop.f32.mrf.mxu0
    %v198 = vadd.f32 0.0, %v197
    %199 = vdwg.mxu0
    %v200 = vadd.f32 %v159, %v195
    %v201 = vadd.f32 %v160, %v198
    %202 = vst.msk [vmem:[#allocation2] sm:$0xff] %vm44, %v200
    %203 = vst.msk [vmem:[#allocation2 + $0x8] sm:$0xff] %vm44, %v201
    // Predicated region
    $region34: #{tpu_custom_call.1} parent=1 // pred_check
      %p204 = pneg %p27
    $region35: #{tpu_custom_call.1} parent=1 // pred_check_branch
      %206 = sbr.rel (%p204) target = $region37
    $region36: #{tpu_custom_call.1} parent=1 // pred_region
      %v207 = vld [vmem:[#allocation2] sm:$0xff]
      %v208 = vld [vmem:[#allocation2 + $0x8] sm:$0xff]
      %v209 = vld [vmem:[%s6] sm:$0x1]
      %v211 = vperm.slane %v209, 0
      %v213 = vadd.f32 %v207, %v211
      %v214 = vadd.f32 %v208, %v211
      %215 = vst.msk [vmem:[#allocation3] sm:$0xff] %vm44, %v213
      %216 = vst.msk [vmem:[#allocation3 + $0x8] sm:$0xff] %vm44, %v214
    $region37: #{tpu_custom_call.1} parent=1 // pred_fallthru
      _
    // Predicated region
    $region38: #{tpu_custom_call.1} parent=1 // pred_check
      _
    $region39: #{tpu_custom_call.1} parent=1 // pred_check_branch
      %218 = sbr.rel (0) target = $region41
    $region40: #{tpu_custom_call.1} parent=1 // pred_region
      %220 = vsyncadd [#allocation4], 0
      %s221 = sshll.u32 [#allocation3], 4
      %s222 = int_to_ptr.vmem [resolvable:$true] %s221
      %s223 = sshll.u32 %s7, 4
      %s224 = int_to_ptr.hbm [resolvable:$true] %s223
      %229 = dma.vmem_to_hbm [thread:$0]  %s222, 256, %s224, [#allocation4], 128, 128, 8
    $region41: #{tpu_custom_call.1} parent=1 // pred_fallthru
      _
    // Predicated region
    $region42: #{tpu_custom_call.1} parent=1 // pred_check
      _
    $region43: #{tpu_custom_call.1} parent=1 // pred_check_branch
      %231 = sbr.rel (0) target = $region45
    $region44: #{tpu_custom_call.1} parent=1 // pred_region
      %233 = dma.done [#allocation4], 256
    $region45: #{tpu_custom_call.1} parent=1 // pred_fallthru
      _
    %234 = vsyncpa [#allocation4], 1

// kernel: tpu_custom_call.1
$region0: #{tpu_custom_call.1}
  #allocation0 [shape = 'u32[]', space=smem, size = 0x4, offset = 0x4, fixed_abs, tag = 'smem constant byte address 0x4 - core index']
  #allocation1 [shape = 'u32[72,128]{1,0:T(1,128)}', space=vmem, size = 0x9000, scoped, tag = 'internal scratch']
  #allocation2 [shape = 'f32[16,32]{1,0:T(8,128)}', space=vmem, size = 0x2000, scoped, tag = 'scratch operand']
  %s0 = inlined_call_operand.vmem [shape: f32[16,32], index: 0, kind: input, shape index: {}]
  %s1 = inlined_call_operand.vmem [shape: f32[32,128], index: 1, kind: input, shape index: {}]
  %s2 = inlined_call_operand.vmem [shape: f32[32,128], index: 2, kind: input, shape index: {}]
  %s3 = inlined_call_operand.vmem [shape: f32[1,128], index: 3, kind: input, shape index: {}]
  %s4 = inlined_call_operand.vmem [shape: f32[1,128], index: 4, kind: input, shape index: {}]
  %s5 = inlined_call_operand.vmem [shape: f32[128,32], index: 5, kind: input, shape index: {}]
  %s6 = inlined_call_operand.vmem [shape: f32[1,32], index: 6, kind: input, shape index: {}]
  %s7 = inlined_call_operand.hbm [shape: f32[16,32], index: 7, kind: output, shape index: {}]
  %s8 = sld [smem:[#allocation0]]
  $region46: #{tpu_custom_call.1} parent=0
    _
  %s10 = ssub.s32 1, %s8
  %s11 = scalar_select 0, %s10, %s8
  $region1: #{tpu_custom_call.1} parent=0
    #allocation3 [shape = 'u8[8192]{0}', space=vmem, size = 0x2000, scoped, tag = 'output window, operand 0, single buffered']
    #allocation4 [shape = 's32[1]{0}', space=sflag, size = 0x4, scoped, tag = 'scoped memory for tpu_custom_call.1']
    %12 = vsyncpa [#allocation4], 0
    // Predicated region
    $region2: #{tpu_custom_call.1} parent=1 // pred_check
      _
    $region3: #{tpu_custom_call.1} parent=1 // pred_check_branch
      %14 = sbr.rel (0) target = $region5
    $region4: #{tpu_custom_call.1} parent=1 // pred_region
      _
    $region5: #{tpu_custom_call.1} parent=1 // pred_fallthru
      _
    // Predicated region
    $region6: #{tpu_custom_call.1} parent=1 // pred_check
      _
    $region7: #{tpu_custom_call.1} parent=1 // pred_check_branch
      %16 = sbr.rel (0) target = $region9
    $region8: #{tpu_custom_call.1} parent=1 // pred_region
      _
    $region9: #{tpu_custom_call.1} parent=1 // pred_fallthru
      _
    // Predicated region
    $region10: #{tpu_custom_call.1} parent=1 // pred_check
      _
    $region11: #{tpu_custom_call.1} parent=1 // pred_check_branch
      %18 = sbr.rel (0) target = $region13
    $region12: #{tpu_custom_call.1} parent=1 // pred_region
      _
    $region13: #{tpu_custom_call.1} parent=1 // pred_fallthru
      _
    // Predicated region
    $region14: #{tpu_custom_call.1} parent=1 // pred_check
      _
    $region15: #{tpu_custom_call.1} parent=1 // pred_check_branch
      %20 = sbr.rel (0) target = $region17
    $region16: #{tpu_custom_call.1} parent=1 // pred_region
      _
    $region17: #{tpu_custom_call.1} parent=1 // pred_fallthru
      _
    // Predicated region
    $region18: #{tpu_custom_call.1} parent=1 // pred_check
      _
    $region19: #{tpu_custom_call.1} parent=1 // pred_check_branch
      %22 = sbr.rel (0) target = $region21
    $region20: #{tpu_custom_call.1} parent=1 // pred_region
      _
    $region21: #{tpu_custom_call.1} parent=1 // pred_fallthru
      _
    // Predicated region
    $region22: #{tpu_custom_call.1} parent=1 // pred_check
      _
    $region23: #{tpu_custom_call.1} parent=1 // pred_check_branch
      %24 = sbr.rel (0) target = $region25
    $region24: #{tpu_custom_call.1} parent=1 // pred_region
      _
    $region25: #{tpu_custom_call.1} parent=1 // pred_fallthru
      _
    // Predicated region
    $region26: #{tpu_custom_call.1} parent=1 // pred_check
      _
    $region27: #{tpu_custom_call.1} parent=1 // pred_check_branch
      %26 = sbr.rel (0) target = $region29
    $region28: #{tpu_custom_call.1} parent=1 // pred_region
      _
    $region29: #{tpu_custom_call.1} parent=1 // pred_fallthru
      _
    %p27 = scmp.eq.s32.totalorder 0, 0
    // Predicated region
    $region30: #{tpu_custom_call.1} parent=1 // pred_check
      %p28 = pneg %p27
    $region31: #{tpu_custom_call.1} parent=1 // pred_check_branch
      %30 = sbr.rel (%p28) target = $region33
    $region32: #{tpu_custom_call.1} parent=1 // pred_region
      %vm31 = vcmask 261120
      %32 = vst.msk [vmem:[#allocation2] sm:$0xff] %vm31, 0.0
      %33 = vst.msk [vmem:[#allocation2 + $0x8] sm:$0xff] %vm31, 0.0
    $region33: #{tpu_custom_call.1} parent=1 // pred_fallthru
      _
    %v34 = vld [vmem:[%s0] sm:$0xff]
    %v35 = vld [vmem:[%s0 + $0x8] sm:$0xff]
    %v36 = vld [vmem:[%s1] sm:$0xff]
    %v37 = vld [vmem:[%s1 + $0x8] sm:$0xff]
    %v38 = vld [vmem:[%s1 + $0x10] sm:$0xff]
    %v39 = vld [vmem:[%s1 + $0x18] sm:$0xff]
    %v40 = vld [vmem:[%s3] sm:$0x1]
    %v42 = vperm.slane %v40, 0
    %vm44 = vcmask 261120
    %v46 = vsel %vm44, %v34, 0
    %v49 = vsel %vm44, %v35, 0
    %51 = vmatpush.msra.mxu0 0.0
    %52 = vmatpush.msra.mxu0 0.0
    %53 = vmatpush.msra.mxu0 0.0
    %54 = vmatpush.msra.mxu0 0.0
    %55 = vmatpush.msra.mxu0 0.0
    %56 = vmatpush.msra.mxu0 0.0
    %57 = vmatpush.msra.mxu0 0.0
    %58 = vmatpush.msra.mxu0 0.0
    %59 = vmatpush.msra.mxu0 0.0
    %60 = vmatpush.msra.mxu0 0.0
    %61 = vmatpush.msra.mxu0 0.0
    %62 = vmatpush.msra.mxu0 0.0
    %63 = vmatpush.msra.mxu0 %v39
    %64 = vmatpush.msra.mxu0 %v38
    %65 = vmatpush.msra.mxu0 %v37
    %66 = vmatpush.msra.mxu0 %v36
    %67 = vmatmul.f32.gmra.mxu0 %v46
    %v68 = vpop.f32.mrf.mxu0
    %v69 = vadd.f32 %v42, %v68
    %70 = vmatmul.f32.gmra.mxu0 %v49
    %v71 = vpop.f32.mrf.mxu0
    %v72 = vadd.f32 %v42, %v71
    %73 = vdwg.mxu0
    %v74 = vld [vmem:[%s2] sm:$0xff]
    %v75 = vld [vmem:[%s2 + $0x8] sm:$0xff]
    %v76 = vld [vmem:[%s2 + $0x10] sm:$0xff]
    %v77 = vld [vmem:[%s2 + $0x18] sm:$0xff]
    %v78 = vld [vmem:[%s4] sm:$0x1]
    %v80 = vperm.slane %v78, 0
    %82 = vmatpush.msra.mxu0 0.0
    %83 = vmatpush.msra.mxu0 0.0
    %84 = vmatpush.msra.mxu0 0.0
    %85 = vmatpush.msra.mxu0 0.0
    %86 = vmatpush.msra.mxu0 0.0
    %87 = vmatpush.msra.mxu0 0.0
    %88 = vmatpush.msra.mxu0 0.0
    %89 = vmatpush.msra.mxu0 0.0
    %90 = vmatpush.msra.mxu0 0.0
    %91 = vmatpush.msra.mxu0 0.0
    %92 = vmatpush.msra.mxu0 0.0
    %93 = vmatpush.msra.mxu0 0.0
    %94 = vmatpush.msra.mxu0 %v77
    %95 = vmatpush.msra.mxu0 %v76
    %96 = vmatpush.msra.mxu0 %v75
    %97 = vmatpush.msra.mxu0 %v74
    %98 = vmatmul.f32.gmra.mxu0 %v46
    %v99 = vpop.f32.mrf.mxu0
    %v100 = vadd.f32 %v80, %v99
    %101 = vmatmul.f32.gmra.mxu0 %v49
    %v102 = vpop.f32.mrf.mxu0
    %v103 = vadd.f32 %v80, %v102
    %104 = vdwg.mxu0
    %v105 = vmul.f32 %v100, 0.5
    %v106 = vmul.f32 %v103, 0.5
    %v107 = vmul.f32 %v100, 0.70710677
    %v108 = vmul.f32 %v103, 0.70710677
    %v109 = vand.u32 2147483647, %v107
    %v110 = vand.u32 2147483647, %v108
    %v111 = vmul.f32 %v109, 0.3275911
    %v112 = vmul.f32 %v110, 0.3275911
    %v113 = vadd.f32 %v111, 1.0
    %v114 = vadd.f32 %v112, 1.0
    %v115 = vrcp.pop %v113
    %v116 = vrcp.pop %v114
    %v117 = vmul.f32 %v115, 1.0614054
    %v118 = vmul.f32 %v116, 1.0614054
    %v119 = vadd.f32 %v117, -1.4531521
    %v120 = vadd.f32 %v118, -1.4531521
    %v121 = vmul.f32 %v119, %v115
    %v122 = vmul.f32 %v120, %v116
    %v123 = vadd.f32 %v121, 1.4214138
    %v124 = vadd.f32 %v122, 1.4214138
    %v125 = vmul.f32 %v123, %v115
    %v126 = vmul.f32 %v124, %v116
    %v127 = vadd.f32 %v125, -0.28449672
    %v128 = vadd.f32 %v126, -0.28449672
    %v129 = vmul.f32 %v127, %v115
    %v130 = vmul.f32 %v128, %v116
    %v131 = vadd.f32 %v129, 0.2548296
    %v132 = vadd.f32 %v130, 0.2548296
    %v133 = vmul.f32 %v131, %v115
    %v134 = vmul.f32 %v132, %v116
    %v135 = vsub.f32 0.0, %v109
    %v136 = vsub.f32 0.0, %v110
    %v137 = vmul.f32 %v135, %v109
    %v138 = vmul.f32 %v136, %v110
    %v139 = vmul.f32 %v137, 1.442695
    %v140 = vpow.pop %v139
    %v141 = vmul.f32 %v138, 1.442695
    %v142 = vpow.pop %v141
    %v143 = vmul.f32 %v133, %v140
    %v144 = vmul.f32 %v134, %v142
    %v145 = vsub.f32 1.0, %v143
    %v146 = vsub.f32 1.0, %v144
    %vm147 = vcmp.lt.f32.partialorder %v107, 0.0
    %vm148 = vcmp.lt.f32.partialorder %v108, 0.0
    %v149 = vsub.f32 0.0, %v145
    %v150 = vsub.f32 0.0, %v146
    %v151 = vsel %vm147, %v149, %v145
    %v152 = vsel %vm148, %v150, %v146
    %v153 = vadd.f32 %v151, 1.0
    %v154 = vadd.f32 %v152, 1.0
    %v155 = vmul.f32 %v105, %v153
    %v156 = vmul.f32 %v106, %v154
    %v157 = vmul.f32 %v155, %v69
    %v158 = vmul.f32 %v156, %v72
    %v159 = vld [vmem:[#allocation2] sm:$0xff]
    %v160 = vld [vmem:[#allocation2 + $0x8] sm:$0xff]
    %v161 = vld [vmem:[%s5] sm:$0xff]
    %v162 = vld [vmem:[%s5 + $0x8] sm:$0xff]
    %v163 = vld [vmem:[%s5 + $0x10] sm:$0xff]
    %v164 = vld [vmem:[%s5 + $0x18] sm:$0xff]
    %v165 = vld [vmem:[%s5 + $0x20] sm:$0xff]
    %v166 = vld [vmem:[%s5 + $0x28] sm:$0xff]
    %v167 = vld [vmem:[%s5 + $0x30] sm:$0xff]
    %v168 = vld [vmem:[%s5 + $0x38] sm:$0xff]
    %v169 = vld [vmem:[%s5 + $0x40] sm:$0xff]
    %v170 = vld [vmem:[%s5 + $0x48] sm:$0xff]
    %v171 = vld [vmem:[%s5 + $0x50] sm:$0xff]
    %v172 = vld [vmem:[%s5 + $0x58] sm:$0xff]
    %v173 = vld [vmem:[%s5 + $0x60] sm:$0xff]
    %v174 = vld [vmem:[%s5 + $0x68] sm:$0xff]
    %v175 = vld [vmem:[%s5 + $0x70] sm:$0xff]
    %v176 = vld [vmem:[%s5 + $0x78] sm:$0xff]
    %177 = vmatpush.msra.mxu0 %v176
    %178 = vmatpush.msra.mxu0 %v175
    %179 = vmatpush.msra.mxu0 %v174
    %180 = vmatpush.msra.mxu0 %v173
    %181 = vmatpush.msra.mxu0 %v172
    %182 = vmatpush.msra.mxu0 %v171
    %183 = vmatpush.msra.mxu0 %v170
    %184 = vmatpush.msra.mxu0 %v169
    %185 = vmatpush.msra.mxu0 %v168
    %186 = vmatpush.msra.mxu0 %v167
    %187 = vmatpush.msra.mxu0 %v166
    %188 = vmatpush.msra.mxu0 %v165
    %189 = vmatpush.msra.mxu0 %v164
    %190 = vmatpush.msra.mxu0 %v163
    %191 = vmatpush.msra.mxu0 %v162
    %192 = vmatpush.msra.mxu0 %v161
    %193 = vmatmul.f32.gmra.mxu0 %v157
    %v194 = vpop.f32.mrf.mxu0
    %v195 = vadd.f32 0.0, %v194
    %196 = vmatmul.f32.gmra.mxu0 %v158
    %v197 = vpop.f32.mrf.mxu0
    %v198 = vadd.f32 0.0, %v197
    %199 = vdwg.mxu0
    %v200 = vadd.f32 %v159, %v195
    %v201 = vadd.f32 %v160, %v198
    %202 = vst.msk [vmem:[#allocation2] sm:$0xff] %vm44, %v200
    %203 = vst.msk [vmem:[#allocation2 + $0x8] sm:$0xff] %vm44, %v201
    // Predicated region
    $region34: #{tpu_custom_call.1} parent=1 // pred_check
      %p204 = pneg %p27
    $region35: #{tpu_custom_call.1} parent=1 // pred_check_branch
      %206 = sbr.rel (%p204) target = $region37
    $region36: #{tpu_custom_call.1} parent=1 // pred_region
      %v207 = vld [vmem:[#allocation2] sm:$0xff]
      %v208 = vld [vmem:[#allocation2 + $0x8] sm:$0xff]
      %v209 = vld [vmem:[%s6] sm:$0x1]
      %v211 = vperm.slane %v209, 0
      %v213 = vadd.f32 %v207, %v211
      %v214 = vadd.f32 %v208, %v211
      %215 = vst.msk [vmem:[#allocation3] sm:$0xff] %vm44, %v213
      %216 = vst.msk [vmem:[#allocation3 + $0x8] sm:$0xff] %vm44, %v214
    $region37: #{tpu_custom_call.1} parent=1 // pred_fallthru
      _
    // Predicated region
    $region38: #{tpu_custom_call.1} parent=1 // pred_check
      _
    $region39: #{tpu_custom_call.1} parent=1 // pred_check_branch
      %218 = sbr.rel (0) target = $region41
    $region40: #{tpu_custom_call.1} parent=1 // pred_region
      %220 = vsyncadd [#allocation4], 0
      %s221 = sshll.u32 [#allocation3], 4
      %s222 = int_to_ptr.vmem [resolvable:$true] %s221
      %s223 = sshll.u32 %s7, 4
      %s224 = int_to_ptr.hbm [resolvable:$true] %s223
      %229 = dma.vmem_to_hbm [thread:$0]  %s222, 256, %s224, [#allocation4], 128, 128, 8
    $region41: #{tpu_custom_call.1} parent=1 // pred_fallthru
      _
    // Predicated region
    $region42: #{tpu_custom_call.1} parent=1 // pred_check
      _
    $region43: #{tpu_custom_call.1} parent=1 // pred_check_branch
      %231 = sbr.rel (0) target = $region45
    $region44: #{tpu_custom_call.1} parent=1 // pred_region
      %233 = dma.done [#allocation4], 256
    $region45: #{tpu_custom_call.1} parent=1 // pred_fallthru
      _
    %234 = vsyncpa [#allocation4], 1

</llo_original>
